<compile_context>
chip_gen: v7x
topology: tpu7x:2x2x1
jax: 0.10.0
libtpu: 0.0.40
codegen_flags: <defaults>
</compile_context>

<pallas_src>
import functools

import jax
import jax.numpy as jnp
import numpy as np
from jax.experimental import pallas as pl
from jax.experimental.pallas import tpu as pltpu


# -----------------------------------------------------------------------------
# Pallas kernel: hoisted input projection + fully unrolled LSTM1 -> ReLU ->
# LSTM2 recurrence (fused layer-2 weights) + single lane-dense output matmul.
# -----------------------------------------------------------------------------
def lstm_decoder_kernel(hidden_ref,   # (B, H) distinct input rows
                        slab_ref,     # (rows_pad, 4H) packed params
                        out_ref,      # (S*B, 4H) time-major flat, lane-padded
                        h2_all,       # scratch (S*B, H)
                        *, seq_len, batch, hidden_size):
    S, B, H = seq_len, batch, hidden_size
    G = 4 * H  # gate width == slab lane width == padded output lane width

    # ---- Slice every weight / bias from the slab exactly once (static slab
    # offsets); each (32,128) f32 weight is only 4 vregs, so everything stays
    # resident across the unrolled recurrence.
    wih1 = slab_ref[0:H, :]                       # (H, 4H)
    whh1 = slab_ref[H:2 * H, :]                   # (H, 4H)
    w2 = slab_ref[2 * H:4 * H, :]                 # (2H, 4H) fused [wih2; whh2]
    wout = slab_ref[4 * H:5 * H, :]               # (H, 4H)  zero-padded lanes >= D
    b1 = slab_ref[5 * H:5 * H + 1, :]             # (1, 4H)  b_ih1 + b_hh1
    b2 = slab_ref[5 * H + 1:5 * H + 2, :]         # (1, 4H)  b_ih2 + b_hh2
    bout = slab_ref[5 * H + 2:5 * H + 3, :]       # (1, 4H)  zero-padded lanes >= D

    # ---- Hoisted LSTM1 input projection over the B DISTINCT rows of `hidden`
    # (the replicated input means per-step / per-replica projections are
    # redundant): one (B,H)x(H,4H) matmul, bias folded in.
    xproj0 = jnp.dot(hidden_ref[...], wih1,
                     preferred_element_type=jnp.float32) + b1      # (B, 4H)

    # Pre-broadcast each distinct projected row once (hoisted out of the loop;
    # JAX does not CSE broadcast_in_dim).
    xrow_b = [jnp.broadcast_to(xproj0[r:r + 1, :], (B, G)) for r in range(B)]

    def cell(gates, c_prev):
        # Full-width transcendentals (2 EUP pushes) then static lane slices,
        # PyTorch gate order i, f, g, o.
        sig = jax.nn.sigmoid(gates)                                # (B, 4H)
        th = jnp.tanh(gates)                                       # (B, 4H)
        i_g = sig[:, 0:H]
        f_g = sig[:, H:2 * H]
        g_g = th[:, 2 * H:3 * H]                                   # tanh lanes!
        o_g = sig[:, 3 * H:4 * H]
        c_new = f_g * c_prev + i_g * g_g
        h_new = o_g * jnp.tanh(c_new)
        return h_new, c_new

    zeros = jnp.zeros((B, H), jnp.float32)
    h1, c1, h2, c2 = zeros, zeros, zeros, zeros

    # ---- Fully unrolled serial recurrence (S is small and static), giving the
    # scheduler cross-step visibility so layer-1 of step t+1 can overlap the
    # tail of step t.
    for t in range(S):
        # Static repeat/reshape pattern: input row for batch b at step t is
        # hidden[(b*S + t) % B].
        rows = [(b * S + t) % B for b in range(B)]
        if all(r == rows[0] for r in rows):
            x1p = xrow_b[rows[0]]                                  # (B, 4H)
        else:
            x1p = jnp.concatenate([xproj0[r:r + 1, :] for r in rows], axis=0)

        g1 = x1p + jnp.dot(h1, whh1, preferred_element_type=jnp.float32)
        h1, c1 = cell(g1, c1)

        x2 = jnp.maximum(h1, 0.0)                                  # ReLU

        # Fused layer-2: one (B,2H)x(2H,4H) matmul instead of two + an add.
        g2 = jnp.dot(jnp.concatenate([x2, h2], axis=-1), w2,
                     preferred_element_type=jnp.float32) + b2
        h2, c2 = cell(g2, c2)

        h2_all[t * B:(t + 1) * B, :] = h2

    # ---- Hoisted output Linear: one (S*B,H)x(H,4H) matmul (lane-padded, so
    # the store is a single unmasked lane-dense block).
    y = jnp.dot(h2_all[...], wout, preferred_element_type=jnp.float32) + bout
    out_ref[...] = y.astype(out_ref.dtype)


# -----------------------------------------------------------------------------
# Parameter packing: one contiguous (rows_pad, 4H) slab.
#   rows [0,H)      : wih1            (transposed weight_ih_l0 of lstm1)
#   rows [H,2H)     : whh1            (transposed weight_hh_l0 of lstm1)
#   rows [2H,4H)    : [wih2; whh2]    (fused layer-2 weights)
#   rows [4H,5H)    : wout, zero-padded to 4H lanes
#   row  5H         : b1 = b_ih1 + b_hh1
#   row  5H+1       : b2 = b_ih2 + b_hh2
#   row  5H+2       : bout, zero-padded to 4H lanes
#   remaining rows  : zero padding to a multiple of 8
# -----------------------------------------------------------------------------
def pack_params(params, hidden_size):
    H = hidden_size
    G = 4 * H
    assert G % 128 == 0, "gate width must be lane-aligned"
    wih1, whh1, b1, wih2, whh2, b2, wout, bout = params
    D = wout.shape[1]
    assert D <= G, "output width must fit in the gate lane width"

    w2 = jnp.concatenate([wih2, whh2], axis=0)                     # (2H, 4H)
    wout_p = jnp.zeros((H, G), jnp.float32).at[:, :D].set(wout)
    bout_p = jnp.zeros((1, G), jnp.float32).at[:, :D].set(bout)

    rows = 5 * H + 3
    rows_pad = -(-rows // 8) * 8
    slab = jnp.concatenate(
        [wih1, whh1, w2, wout_p, b1, b2, bout_p,
         jnp.zeros((rows_pad - rows, G), jnp.float32)], axis=0)
    return slab, D


# -----------------------------------------------------------------------------
# Wrapper
# -----------------------------------------------------------------------------
@functools.partial(jax.jit, static_argnames=("seq_len", "out_size"))
def lstm_decoder_forward(hidden, slab, seq_len, out_size):
    """hidden: (B, H) float32, slab: packed params -> output (B, seq_len, D)."""
    B, H = hidden.shape
    S, D = seq_len, out_size
    G = 4 * H
    rows_pad = slab.shape[0]

    kernel = functools.partial(lstm_decoder_kernel,
                               seq_len=S, batch=B, hidden_size=H)

    # TODO(synk): for throughput on v7x, batch several independent decoder
    # invocations (or a much larger B) into one pallas_call with a leading
    # "parallel" grid axis; at B=2 the single-TC launch is the right call.
    out_flat = pl.pallas_call(
        kernel,
        out_shape=jax.ShapeDtypeStruct((S * B, G), jnp.float32),
        grid=(1,),
        in_specs=[pl.BlockSpec((B, H), lambda i: (0, 0)),
                  pl.BlockSpec((rows_pad, G), lambda i: (0, 0))],
        out_specs=pl.BlockSpec((S * B, G), lambda i: (0, 0)),
        scratch_shapes=[pltpu.VMEM((S * B, H), jnp.float32)],
        compiler_params=pltpu.CompilerParams(
            dimension_semantics=("arbitrary",)),
    )(hidden.astype(jnp.float32), slab)

    # (S*B, 4H) time-major flat -> (B, S, D) batch_first, drop lane padding.
    return jnp.transpose(out_flat.reshape(S, B, G), (1, 0, 2))[:, :, :D]


# -----------------------------------------------------------------------------
# Deterministic parameter init (synthetic; mirrors shapes of the PyTorch module
# with num_layers=1, bidirectional1=False, bidirectional2=False).
# -----------------------------------------------------------------------------
def init_params(key, hidden_size, dynamic_input_size):
    H, D = hidden_size, dynamic_input_size
    ks = jax.random.split(key, 6)
    # kaiming_uniform-ish bound for tanh, fan_in = H
    bound = (5.0 / 3.0) * np.sqrt(3.0 / H)

    def u(k, shape, b):
        return jax.random.uniform(k, shape, jnp.float32, minval=-b, maxval=b)

    wih1 = u(ks[0], (H, 4 * H), bound)             # transposed weight_ih_l0
    whh1 = u(ks[1], (H, 4 * H), bound)             # transposed weight_hh_l0
    b1 = jnp.full((1, 4 * H), 0.02, jnp.float32)   # b_ih + b_hh, each 0.01
    wih2 = u(ks[2], (H, 4 * H), bound)
    whh2 = u(ks[3], (H, 4 * H), bound)
    b2 = jnp.full((1, 4 * H), 0.02, jnp.float32)
    wout = u(ks[4], (H, D), np.sqrt(3.0 / H))      # transposed Linear weight
    bout = jnp.full((1, D), 0.01, jnp.float32)
    return (wih1, whh1, b1, wih2, whh2, b2, wout, bout)


# -----------------------------------------------------------------------------
# Pure-JAX reference (for correctness check)
# -----------------------------------------------------------------------------
def _lstm_ref(x, wih, whh, b):
    B = x.shape[0]
    H = whh.shape[0]

    def step(carry, x_t):
        h, c = carry
        gates = x_t @ wih + h @ whh + b
        i, f, g, o = jnp.split(gates, 4, axis=-1)
        i, f, o = jax.nn.sigmoid(i), jax.nn.sigmoid(f), jax.nn.sigmoid(o)
        g = jnp.tanh(g)
        c = f * c + i * g
        h = o * jnp.tanh(c)
        return (h, c), h

    init = (jnp.zeros((B, H), jnp.float32), jnp.zeros((B, H), jnp.float32))
    _, hs = jax.lax.scan(step, init, jnp.transpose(x, (1, 0, 2)))
    return jnp.transpose(hs, (1, 0, 2))


def reference_forward(hidden, params, seq_len):
    B, H = hidden.shape
    S = seq_len
    wih1, whh1, b1, wih2, whh2, b2, wout, bout = params
    idx = (jnp.arange(B)[:, None] * S + jnp.arange(S)[None, :]) % B
    x = hidden[idx]
    y1 = jnp.maximum(_lstm_ref(x, wih1, whh1, b1), 0.0)
    y2 = _lstm_ref(y1, wih2, whh2, b2)
    return y2 @ wout + bout


# -----------------------------------------------------------------------------
if __name__ == "__main__":
    # Module config: seq_len=8, dynamic_input_size=4, hidden_size=32,
    # num_layers=1, bidirectional1=False, bidirectional2=False, num_head=4.
    B, S, H, D = 2, 8, 32, 4

    key = jax.random.PRNGKey(0)
    k_h, k_p = jax.random.split(key)
    hidden = jax.random.normal(k_h, (B, H), jnp.float32)
    params = init_params(k_p, H, D)

    slab, out_size = pack_params(params, H)
    slab = jax.block_until_ready(slab)

    out = lstm_decoder_forward(hidden, slab, S, out_size)
    out = jax.block_until_ready(out)
    assert out.shape == (B, S, D), out.shape

    ref = reference_forward(hidden, params, S)
    np.testing.assert_allclose(np.asarray(out), np.asarray(ref),
                               rtol=1e-4, atol=1e-4)

    print("KERNEL_OK")
</pallas_src>

<mosaic_0001>
module attributes {stable_mosaic.version = 11 : i64} {
  func.func @lstm_decoder_kernel(%arg0: i32, %arg1: memref<2x32xf32, #tpu.memory_space<vmem>>, %arg2: memref<168x128xf32, #tpu.memory_space<vmem>>, %arg3: memref<16x128xf32, #tpu.memory_space<vmem>>, %arg4: memref<16x32xf32, #tpu.memory_space<vmem>>) attributes {dimension_semantics = [#tpu.dimension_semantics<arbitrary>], iteration_bounds = array<i64: 1>, scalar_prefetch = 0 : i64, scratch_operands = 1 : i64, tpu.core_type = #tpu.core_type<tc>, window_params = [{pipeline_mode = #tpu.pipeline_mode<synchronous>, transform_indices = @transform_0, window_bounds = array<i64: 2, 32>}, {pipeline_mode = #tpu.pipeline_mode<synchronous>, transform_indices = @transform_1, window_bounds = array<i64: 168, 128>}, {pipeline_mode = #tpu.pipeline_mode<synchronous>, transform_indices = @transform_2, window_bounds = array<i64: 16, 128>}]} {
    %c0 = arith.constant 0 : index
    %c0_0 = arith.constant 0 : index
    %0 = vector.load %arg2[%c0, %c0_0] : memref<168x128xf32, #tpu.memory_space<vmem>>, vector<32x128xf32>
    %c32 = arith.constant 32 : index
    %c0_1 = arith.constant 0 : index
    %1 = vector.load %arg2[%c32, %c0_1] : memref<168x128xf32, #tpu.memory_space<vmem>>, vector<32x128xf32>
    %c64 = arith.constant 64 : index
    %c0_2 = arith.constant 0 : index
    %2 = vector.load %arg2[%c64, %c0_2] : memref<168x128xf32, #tpu.memory_space<vmem>>, vector<64x128xf32>
    %c128 = arith.constant 128 : index
    %c0_3 = arith.constant 0 : index
    %3 = vector.load %arg2[%c128, %c0_3] : memref<168x128xf32, #tpu.memory_space<vmem>>, vector<32x128xf32>
    %c160 = arith.constant 160 : index
    %c0_4 = arith.constant 0 : index
    %4 = vector.load %arg2[%c160, %c0_4] : memref<168x128xf32, #tpu.memory_space<vmem>>, vector<1x128xf32>
    %c161 = arith.constant 161 : index
    %c0_5 = arith.constant 0 : index
    %5 = vector.load %arg2[%c161, %c0_5] : memref<168x128xf32, #tpu.memory_space<vmem>>, vector<1x128xf32>
    %c162 = arith.constant 162 : index
    %c0_6 = arith.constant 0 : index
    %6 = vector.load %arg2[%c162, %c0_6] : memref<168x128xf32, #tpu.memory_space<vmem>>, vector<1x128xf32>
    %c0_7 = arith.constant 0 : index
    %c0_8 = arith.constant 0 : index
    %7 = vector.load %arg1[%c0_7, %c0_8] : memref<2x32xf32, #tpu.memory_space<vmem>>, vector<2x32xf32>
    %cst = arith.constant dense<0.000000e+00> : vector<2x128xf32>
    %8 = tpu.matmul %7, %0, %cst {dimension_numbers = #tpu.dot_dimension_numbers<[1], [0], [0], [1], [0, 0, 1, 1], [], []>} : vector<2x32xf32>, vector<32x128xf32>, vector<2x128xf32> -> vector<2x128xf32>
    %9 = vector.broadcast %4 : vector<1x128xf32> to vector<2x128xf32>
    %10 = arith.addf %8, %9 : vector<2x128xf32>
    %11 = vector.extract_strided_slice %10 {offsets = [0, 0], sizes = [1, 128], strides = [1, 1]} : vector<2x128xf32> to vector<1x128xf32>
    %12 = vector.shape_cast %11 : vector<1x128xf32> to vector<1x128xf32>
    %13 = vector.broadcast %12 : vector<1x128xf32> to vector<2x128xf32>
    %14 = vector.extract_strided_slice %10 {offsets = [1, 0], sizes = [1, 128], strides = [1, 1]} : vector<2x128xf32> to vector<1x128xf32>
    %15 = vector.shape_cast %14 : vector<1x128xf32> to vector<1x128xf32>
    %16 = vector.broadcast %15 : vector<1x128xf32> to vector<2x128xf32>
    %cst_9 = arith.constant 0.000000e+00 : f32
    %17 = vector.broadcast %cst_9 : f32 to vector<2x32xf32>
    %cst_10 = arith.constant dense<0.000000e+00> : vector<2x128xf32>
    %18 = tpu.matmul %17, %1, %cst_10 {dimension_numbers = #tpu.dot_dimension_numbers<[1], [0], [0], [1], [0, 0, 1, 1], [], []>} : vector<2x32xf32>, vector<32x128xf32>, vector<2x128xf32> -> vector<2x128xf32>
    %19 = arith.addf %13, %18 : vector<2x128xf32>
    %20 = arith.negf %19 : vector<2x128xf32>
    %21 = math.exp %20 : vector<2x128xf32>
    %cst_11 = arith.constant 1.000000e+00 : f32
    %22 = vector.broadcast %cst_11 : f32 to vector<2x128xf32>
    %23 = arith.addf %22, %21 : vector<2x128xf32>
    %24 = arith.divf %22, %23 : vector<2x128xf32>
    %25 = math.tanh %19 : vector<2x128xf32>
    %26 = vector.extract_strided_slice %24 {offsets = [0, 0], sizes = [2, 32], strides = [1, 1]} : vector<2x128xf32> to vector<2x32xf32>
    %27 = vector.extract_strided_slice %24 {offsets = [0, 32], sizes = [2, 32], strides = [1, 1]} : vector<2x128xf32> to vector<2x32xf32>
    %28 = vector.extract_strided_slice %25 {offsets = [0, 64], sizes = [2, 32], strides = [1, 1]} : vector<2x128xf32> to vector<2x32xf32>
    %29 = vector.extract_strided_slice %24 {offsets = [0, 96], sizes = [2, 32], strides = [1, 1]} : vector<2x128xf32> to vector<2x32xf32>
    %30 = arith.mulf %27, %17 : vector<2x32xf32>
    %31 = arith.mulf %26, %28 : vector<2x32xf32>
    %32 = arith.addf %30, %31 : vector<2x32xf32>
    %33 = math.tanh %32 : vector<2x32xf32>
    %34 = arith.mulf %29, %33 : vector<2x32xf32>
    %cst_12 = arith.constant 0.000000e+00 : f32
    %35 = vector.broadcast %cst_12 : f32 to vector<2x32xf32>
    %36 = arith.maximumf %34, %35 : vector<2x32xf32>
    %37 = tpu.concatenate %36, %17 in 1 : vector<2x32xf32>, vector<2x32xf32> -> vector<2x64xf32>
    %cst_13 = arith.constant dense<0.000000e+00> : vector<2x128xf32>
    %38 = tpu.matmul %37, %2, %cst_13 {dimension_numbers = #tpu.dot_dimension_numbers<[1], [0], [0], [1], [0, 0, 1, 1], [], []>} : vector<2x64xf32>, vector<64x128xf32>, vector<2x128xf32> -> vector<2x128xf32>
    %39 = vector.broadcast %5 : vector<1x128xf32> to vector<2x128xf32>
    %40 = arith.addf %38, %39 : vector<2x128xf32>
    %41 = arith.negf %40 : vector<2x128xf32>
    %42 = math.exp %41 : vector<2x128xf32>
    %cst_14 = arith.constant 1.000000e+00 : f32
    %43 = vector.broadcast %cst_14 : f32 to vector<2x128xf32>
    %44 = arith.addf %43, %42 : vector<2x128xf32>
    %45 = arith.divf %43, %44 : vector<2x128xf32>
    %46 = math.tanh %40 : vector<2x128xf32>
    %47 = vector.extract_strided_slice %45 {offsets = [0, 0], sizes = [2, 32], strides = [1, 1]} : vector<2x128xf32> to vector<2x32xf32>
    %48 = vector.extract_strided_slice %45 {offsets = [0, 32], sizes = [2, 32], strides = [1, 1]} : vector<2x128xf32> to vector<2x32xf32>
    %49 = vector.extract_strided_slice %46 {offsets = [0, 64], sizes = [2, 32], strides = [1, 1]} : vector<2x128xf32> to vector<2x32xf32>
    %50 = vector.extract_strided_slice %45 {offsets = [0, 96], sizes = [2, 32], strides = [1, 1]} : vector<2x128xf32> to vector<2x32xf32>
    %51 = arith.mulf %48, %17 : vector<2x32xf32>
    %52 = arith.mulf %47, %49 : vector<2x32xf32>
    %53 = arith.addf %51, %52 : vector<2x32xf32>
    %54 = math.tanh %53 : vector<2x32xf32>
    %55 = arith.mulf %50, %54 : vector<2x32xf32>
    %c0_15 = arith.constant 0 : index
    %c0_16 = arith.constant 0 : index
    %56 = vector.load %arg4[%c0_15, %c0_16] : memref<16x32xf32, #tpu.memory_space<vmem>>, vector<2x32xf32>
    tpu.vector_store %arg4[%c0_15, %c0_16], %55 {strides = array<i32>} : memref<16x32xf32, #tpu.memory_space<vmem>>, vector<2x32xf32>,
    %cst_17 = arith.constant dense<0.000000e+00> : vector<2x128xf32>
    %57 = tpu.matmul %34, %1, %cst_17 {dimension_numbers = #tpu.dot_dimension_numbers<[1], [0], [0], [1], [0, 0, 1, 1], [], []>} : vector<2x32xf32>, vector<32x128xf32>, vector<2x128xf32> -> vector<2x128xf32>
    %58 = arith.addf %16, %57 : vector<2x128xf32>
    %59 = arith.negf %58 : vector<2x128xf32>
    %60 = math.exp %59 : vector<2x128xf32>
    %cst_18 = arith.constant 1.000000e+00 : f32
    %61 = vector.broadcast %cst_18 : f32 to vector<2x128xf32>
    %62 = arith.addf %61, %60 : vector<2x128xf32>
    %63 = arith.divf %61, %62 : vector<2x128xf32>
    %64 = math.tanh %58 : vector<2x128xf32>
    %65 = vector.extract_strided_slice %63 {offsets = [0, 0], sizes = [2, 32], strides = [1, 1]} : vector<2x128xf32> to vector<2x32xf32>
    %66 = vector.extract_strided_slice %63 {offsets = [0, 32], sizes = [2, 32], strides = [1, 1]} : vector<2x128xf32> to vector<2x32xf32>
    %67 = vector.extract_strided_slice %64 {offsets = [0, 64], sizes = [2, 32], strides = [1, 1]} : vector<2x128xf32> to vector<2x32xf32>
    %68 = vector.extract_strided_slice %63 {offsets = [0, 96], sizes = [2, 32], strides = [1, 1]} : vector<2x128xf32> to vector<2x32xf32>
    %69 = arith.mulf %66, %32 : vector<2x32xf32>
    %70 = arith.mulf %65, %67 : vector<2x32xf32>
    %71 = arith.addf %69, %70 : vector<2x32xf32>
    %72 = math.tanh %71 : vector<2x32xf32>
    %73 = arith.mulf %68, %72 : vector<2x32xf32>
    %cst_19 = arith.constant 0.000000e+00 : f32
    %74 = vector.broadcast %cst_19 : f32 to vector<2x32xf32>
    %75 = arith.maximumf %73, %74 : vector<2x32xf32>
    %76 = tpu.concatenate %75, %55 in 1 : vector<2x32xf32>, vector<2x32xf32> -> vector<2x64xf32>
    %cst_20 = arith.constant dense<0.000000e+00> : vector<2x128xf32>
    %77 = tpu.matmul %76, %2, %cst_20 {dimension_numbers = #tpu.dot_dimension_numbers<[1], [0], [0], [1], [0, 0, 1, 1], [], []>} : vector<2x64xf32>, vector<64x128xf32>, vector<2x128xf32> -> vector<2x128xf32>
    %78 = vector.broadcast %5 : vector<1x128xf32> to vector<2x128xf32>
    %79 = arith.addf %77, %78 : vector<2x128xf32>
    %80 = arith.negf %79 : vector<2x128xf32>
    %81 = math.exp %80 : vector<2x128xf32>
    %cst_21 = arith.constant 1.000000e+00 : f32
    %82 = vector.broadcast %cst_21 : f32 to vector<2x128xf32>
    %83 = arith.addf %82, %81 : vector<2x128xf32>
    %84 = arith.divf %82, %83 : vector<2x128xf32>
    %85 = math.tanh %79 : vector<2x128xf32>
    %86 = vector.extract_strided_slice %84 {offsets = [0, 0], sizes = [2, 32], strides = [1, 1]} : vector<2x128xf32> to vector<2x32xf32>
    %87 = vector.extract_strided_slice %84 {offsets = [0, 32], sizes = [2, 32], strides = [1, 1]} : vector<2x128xf32> to vector<2x32xf32>
    %88 = vector.extract_strided_slice %85 {offsets = [0, 64], sizes = [2, 32], strides = [1, 1]} : vector<2x128xf32> to vector<2x32xf32>
    %89 = vector.extract_strided_slice %84 {offsets = [0, 96], sizes = [2, 32], strides = [1, 1]} : vector<2x128xf32> to vector<2x32xf32>
    %90 = arith.mulf %87, %53 : vector<2x32xf32>
    %91 = arith.mulf %86, %88 : vector<2x32xf32>
    %92 = arith.addf %90, %91 : vector<2x32xf32>
    %93 = math.tanh %92 : vector<2x32xf32>
    %94 = arith.mulf %89, %93 : vector<2x32xf32>
    %c2 = arith.constant 2 : index
    %c0_22 = arith.constant 0 : index
    %95 = vector.load %arg4[%c2, %c0_22] : memref<16x32xf32, #tpu.memory_space<vmem>>, vector<2x32xf32>
    tpu.vector_store %arg4[%c2, %c0_22], %94 {strides = array<i32>} : memref<16x32xf32, #tpu.memory_space<vmem>>, vector<2x32xf32>,
    %cst_23 = arith.constant dense<0.000000e+00> : vector<2x128xf32>
    %96 = tpu.matmul %73, %1, %cst_23 {dimension_numbers = #tpu.dot_dimension_numbers<[1], [0], [0], [1], [0, 0, 1, 1], [], []>} : vector<2x32xf32>, vector<32x128xf32>, vector<2x128xf32> -> vector<2x128xf32>
    %97 = arith.addf %13, %96 : vector<2x128xf32>
    %98 = arith.negf %97 : vector<2x128xf32>
    %99 = math.exp %98 : vector<2x128xf32>
    %cst_24 = arith.constant 1.000000e+00 : f32
    %100 = vector.broadcast %cst_24 : f32 to vector<2x128xf32>
    %101 = arith.addf %100, %99 : vector<2x128xf32>
    %102 = arith.divf %100, %101 : vector<2x128xf32>
    %103 = math.tanh %97 : vector<2x128xf32>
    %104 = vector.extract_strided_slice %102 {offsets = [0, 0], sizes = [2, 32], strides = [1, 1]} : vector<2x128xf32> to vector<2x32xf32>
    %105 = vector.extract_strided_slice %102 {offsets = [0, 32], sizes = [2, 32], strides = [1, 1]} : vector<2x128xf32> to vector<2x32xf32>
    %106 = vector.extract_strided_slice %103 {offsets = [0, 64], sizes = [2, 32], strides = [1, 1]} : vector<2x128xf32> to vector<2x32xf32>
    %107 = vector.extract_strided_slice %102 {offsets = [0, 96], sizes = [2, 32], strides = [1, 1]} : vector<2x128xf32> to vector<2x32xf32>
    %108 = arith.mulf %105, %71 : vector<2x32xf32>
    %109 = arith.mulf %104, %106 : vector<2x32xf32>
    %110 = arith.addf %108, %109 : vector<2x32xf32>
    %111 = math.tanh %110 : vector<2x32xf32>
    %112 = arith.mulf %107, %111 : vector<2x32xf32>
    %cst_25 = arith.constant 0.000000e+00 : f32
    %113 = vector.broadcast %cst_25 : f32 to vector<2x32xf32>
    %114 = arith.maximumf %112, %113 : vector<2x32xf32>
    %115 = tpu.concatenate %114, %94 in 1 : vector<2x32xf32>, vector<2x32xf32> -> vector<2x64xf32>
    %cst_26 = arith.constant dense<0.000000e+00> : vector<2x128xf32>
    %116 = tpu.matmul %115, %2, %cst_26 {dimension_numbers = #tpu.dot_dimension_numbers<[1], [0], [0], [1], [0, 0, 1, 1], [], []>} : vector<2x64xf32>, vector<64x128xf32>, vector<2x128xf32> -> vector<2x128xf32>
    %117 = vector.broadcast %5 : vector<1x128xf32> to vector<2x128xf32>
    %118 = arith.addf %116, %117 : vector<2x128xf32>
    %119 = arith.negf %118 : vector<2x128xf32>
    %120 = math.exp %119 : vector<2x128xf32>
    %cst_27 = arith.constant 1.000000e+00 : f32
    %121 = vector.broadcast %cst_27 : f32 to vector<2x128xf32>
    %122 = arith.addf %121, %120 : vector<2x128xf32>
    %123 = arith.divf %121, %122 : vector<2x128xf32>
    %124 = math.tanh %118 : vector<2x128xf32>
    %125 = vector.extract_strided_slice %123 {offsets = [0, 0], sizes = [2, 32], strides = [1, 1]} : vector<2x128xf32> to vector<2x32xf32>
    %126 = vector.extract_strided_slice %123 {offsets = [0, 32], sizes = [2, 32], strides = [1, 1]} : vector<2x128xf32> to vector<2x32xf32>
    %127 = vector.extract_strided_slice %124 {offsets = [0, 64], sizes = [2, 32], strides = [1, 1]} : vector<2x128xf32> to vector<2x32xf32>
    %128 = vector.extract_strided_slice %123 {offsets = [0, 96], sizes = [2, 32], strides = [1, 1]} : vector<2x128xf32> to vector<2x32xf32>
    %129 = arith.mulf %126, %92 : vector<2x32xf32>
    %130 = arith.mulf %125, %127 : vector<2x32xf32>
    %131 = arith.addf %129, %130 : vector<2x32xf32>
    %132 = math.tanh %131 : vector<2x32xf32>
    %133 = arith.mulf %128, %132 : vector<2x32xf32>
    %c4 = arith.constant 4 : index
    %c0_28 = arith.constant 0 : index
    %134 = vector.load %arg4[%c4, %c0_28] : memref<16x32xf32, #tpu.memory_space<vmem>>, vector<2x32xf32>
    tpu.vector_store %arg4[%c4, %c0_28], %133 {strides = array<i32>} : memref<16x32xf32, #tpu.memory_space<vmem>>, vector<2x32xf32>,
    %cst_29 = arith.constant dense<0.000000e+00> : vector<2x128xf32>
    %135 = tpu.matmul %112, %1, %cst_29 {dimension_numbers = #tpu.dot_dimension_numbers<[1], [0], [0], [1], [0, 0, 1, 1], [], []>} : vector<2x32xf32>, vector<32x128xf32>, vector<2x128xf32> -> vector<2x128xf32>
    %136 = arith.addf %16, %135 : vector<2x128xf32>
    %137 = arith.negf %136 : vector<2x128xf32>
    %138 = math.exp %137 : vector<2x128xf32>
    %cst_30 = arith.constant 1.000000e+00 : f32
    %139 = vector.broadcast %cst_30 : f32 to vector<2x128xf32>
    %140 = arith.addf %139, %138 : vector<2x128xf32>
    %141 = arith.divf %139, %140 : vector<2x128xf32>
    %142 = math.tanh %136 : vector<2x128xf32>
    %143 = vector.extract_strided_slice %141 {offsets = [0, 0], sizes = [2, 32], strides = [1, 1]} : vector<2x128xf32> to vector<2x32xf32>
    %144 = vector.extract_strided_slice %141 {offsets = [0, 32], sizes = [2, 32], strides = [1, 1]} : vector<2x128xf32> to vector<2x32xf32>
    %145 = vector.extract_strided_slice %142 {offsets = [0, 64], sizes = [2, 32], strides = [1, 1]} : vector<2x128xf32> to vector<2x32xf32>
    %146 = vector.extract_strided_slice %141 {offsets = [0, 96], sizes = [2, 32], strides = [1, 1]} : vector<2x128xf32> to vector<2x32xf32>
    %147 = arith.mulf %144, %110 : vector<2x32xf32>
    %148 = arith.mulf %143, %145 : vector<2x32xf32>
    %149 = arith.addf %147, %148 : vector<2x32xf32>
    %150 = math.tanh %149 : vector<2x32xf32>
    %151 = arith.mulf %146, %150 : vector<2x32xf32>
    %cst_31 = arith.constant 0.000000e+00 : f32
    %152 = vector.broadcast %cst_31 : f32 to vector<2x32xf32>
    %153 = arith.maximumf %151, %152 : vector<2x32xf32>
    %154 = tpu.concatenate %153, %133 in 1 : vector<2x32xf32>, vector<2x32xf32> -> vector<2x64xf32>
    %cst_32 = arith.constant dense<0.000000e+00> : vector<2x128xf32>
    %155 = tpu.matmul %154, %2, %cst_32 {dimension_numbers = #tpu.dot_dimension_numbers<[1], [0], [0], [1], [0, 0, 1, 1], [], []>} : vector<2x64xf32>, vector<64x128xf32>, vector<2x128xf32> -> vector<2x128xf32>
    %156 = vector.broadcast %5 : vector<1x128xf32> to vector<2x128xf32>
    %157 = arith.addf %155, %156 : vector<2x128xf32>
    %158 = arith.negf %157 : vector<2x128xf32>
    %159 = math.exp %158 : vector<2x128xf32>
    %cst_33 = arith.constant 1.000000e+00 : f32
    %160 = vector.broadcast %cst_33 : f32 to vector<2x128xf32>
    %161 = arith.addf %160, %159 : vector<2x128xf32>
    %162 = arith.divf %160, %161 : vector<2x128xf32>
    %163 = math.tanh %157 : vector<2x128xf32>
    %164 = vector.extract_strided_slice %162 {offsets = [0, 0], sizes = [2, 32], strides = [1, 1]} : vector<2x128xf32> to vector<2x32xf32>
    %165 = vector.extract_strided_slice %162 {offsets = [0, 32], sizes = [2, 32], strides = [1, 1]} : vector<2x128xf32> to vector<2x32xf32>
    %166 = vector.extract_strided_slice %163 {offsets = [0, 64], sizes = [2, 32], strides = [1, 1]} : vector<2x128xf32> to vector<2x32xf32>
    %167 = vector.extract_strided_slice %162 {offsets = [0, 96], sizes = [2, 32], strides = [1, 1]} : vector<2x128xf32> to vector<2x32xf32>
    %168 = arith.mulf %165, %131 : vector<2x32xf32>
    %169 = arith.mulf %164, %166 : vector<2x32xf32>
    %170 = arith.addf %168, %169 : vector<2x32xf32>
    %171 = math.tanh %170 : vector<2x32xf32>
    %172 = arith.mulf %167, %171 : vector<2x32xf32>
    %c6 = arith.constant 6 : index
    %c0_34 = arith.constant 0 : index
    %173 = vector.load %arg4[%c6, %c0_34] : memref<16x32xf32, #tpu.memory_space<vmem>>, vector<2x32xf32>
    tpu.vector_store %arg4[%c6, %c0_34], %172 {strides = array<i32>} : memref<16x32xf32, #tpu.memory_space<vmem>>, vector<2x32xf32>,
    %cst_35 = arith.constant dense<0.000000e+00> : vector<2x128xf32>
    %174 = tpu.matmul %151, %1, %cst_35 {dimension_numbers = #tpu.dot_dimension_numbers<[1], [0], [0], [1], [0, 0, 1, 1], [], []>} : vector<2x32xf32>, vector<32x128xf32>, vector<2x128xf32> -> vector<2x128xf32>
    %175 = arith.addf %13, %174 : vector<2x128xf32>
    %176 = arith.negf %175 : vector<2x128xf32>
    %177 = math.exp %176 : vector<2x128xf32>
    %cst_36 = arith.constant 1.000000e+00 : f32
    %178 = vector.broadcast %cst_36 : f32 to vector<2x128xf32>
    %179 = arith.addf %178, %177 : vector<2x128xf32>
    %180 = arith.divf %178, %179 : vector<2x128xf32>
    %181 = math.tanh %175 : vector<2x128xf32>
    %182 = vector.extract_strided_slice %180 {offsets = [0, 0], sizes = [2, 32], strides = [1, 1]} : vector<2x128xf32> to vector<2x32xf32>
    %183 = vector.extract_strided_slice %180 {offsets = [0, 32], sizes = [2, 32], strides = [1, 1]} : vector<2x128xf32> to vector<2x32xf32>
    %184 = vector.extract_strided_slice %181 {offsets = [0, 64], sizes = [2, 32], strides = [1, 1]} : vector<2x128xf32> to vector<2x32xf32>
    %185 = vector.extract_strided_slice %180 {offsets = [0, 96], sizes = [2, 32], strides = [1, 1]} : vector<2x128xf32> to vector<2x32xf32>
    %186 = arith.mulf %183, %149 : vector<2x32xf32>
    %187 = arith.mulf %182, %184 : vector<2x32xf32>
    %188 = arith.addf %186, %187 : vector<2x32xf32>
    %189 = math.tanh %188 : vector<2x32xf32>
    %190 = arith.mulf %185, %189 : vector<2x32xf32>
    %cst_37 = arith.constant 0.000000e+00 : f32
    %191 = vector.broadcast %cst_37 : f32 to vector<2x32xf32>
    %192 = arith.maximumf %190, %191 : vector<2x32xf32>
    %193 = tpu.concatenate %192, %172 in 1 : vector<2x32xf32>, vector<2x32xf32> -> vector<2x64xf32>
    %cst_38 = arith.constant dense<0.000000e+00> : vector<2x128xf32>
    %194 = tpu.matmul %193, %2, %cst_38 {dimension_numbers = #tpu.dot_dimension_numbers<[1], [0], [0], [1], [0, 0, 1, 1], [], []>} : vector<2x64xf32>, vector<64x128xf32>, vector<2x128xf32> -> vector<2x128xf32>
    %195 = vector.broadcast %5 : vector<1x128xf32> to vector<2x128xf32>
    %196 = arith.addf %194, %195 : vector<2x128xf32>
    %197 = arith.negf %196 : vector<2x128xf32>
    %198 = math.exp %197 : vector<2x128xf32>
    %cst_39 = arith.constant 1.000000e+00 : f32
    %199 = vector.broadcast %cst_39 : f32 to vector<2x128xf32>
    %200 = arith.addf %199, %198 : vector<2x128xf32>
    %201 = arith.divf %199, %200 : vector<2x128xf32>
    %202 = math.tanh %196 : vector<2x128xf32>
    %203 = vector.extract_strided_slice %201 {offsets = [0, 0], sizes = [2, 32], strides = [1, 1]} : vector<2x128xf32> to vector<2x32xf32>
    %204 = vector.extract_strided_slice %201 {offsets = [0, 32], sizes = [2, 32], strides = [1, 1]} : vector<2x128xf32> to vector<2x32xf32>
    %205 = vector.extract_strided_slice %202 {offsets = [0, 64], sizes = [2, 32], strides = [1, 1]} : vector<2x128xf32> to vector<2x32xf32>
    %206 = vector.extract_strided_slice %201 {offsets = [0, 96], sizes = [2, 32], strides = [1, 1]} : vector<2x128xf32> to vector<2x32xf32>
    %207 = arith.mulf %204, %170 : vector<2x32xf32>
    %208 = arith.mulf %203, %205 : vector<2x32xf32>
    %209 = arith.addf %207, %208 : vector<2x32xf32>
    %210 = math.tanh %209 : vector<2x32xf32>
    %211 = arith.mulf %206, %210 : vector<2x32xf32>
    %c8 = arith.constant 8 : index
    %c0_40 = arith.constant 0 : index
    %212 = vector.load %arg4[%c8, %c0_40] : memref<16x32xf32, #tpu.memory_space<vmem>>, vector<2x32xf32>
    tpu.vector_store %arg4[%c8, %c0_40], %211 {strides = array<i32>} : memref<16x32xf32, #tpu.memory_space<vmem>>, vector<2x32xf32>,
    %cst_41 = arith.constant dense<0.000000e+00> : vector<2x128xf32>
    %213 = tpu.matmul %190, %1, %cst_41 {dimension_numbers = #tpu.dot_dimension_numbers<[1], [0], [0], [1], [0, 0, 1, 1], [], []>} : vector<2x32xf32>, vector<32x128xf32>, vector<2x128xf32> -> vector<2x128xf32>
    %214 = arith.addf %16, %213 : vector<2x128xf32>
    %215 = arith.negf %214 : vector<2x128xf32>
    %216 = math.exp %215 : vector<2x128xf32>
    %cst_42 = arith.constant 1.000000e+00 : f32
    %217 = vector.broadcast %cst_42 : f32 to vector<2x128xf32>
    %218 = arith.addf %217, %216 : vector<2x128xf32>
    %219 = arith.divf %217, %218 : vector<2x128xf32>
    %220 = math.tanh %214 : vector<2x128xf32>
    %221 = vector.extract_strided_slice %219 {offsets = [0, 0], sizes = [2, 32], strides = [1, 1]} : vector<2x128xf32> to vector<2x32xf32>
    %222 = vector.extract_strided_slice %219 {offsets = [0, 32], sizes = [2, 32], strides = [1, 1]} : vector<2x128xf32> to vector<2x32xf32>
    %223 = vector.extract_strided_slice %220 {offsets = [0, 64], sizes = [2, 32], strides = [1, 1]} : vector<2x128xf32> to vector<2x32xf32>
    %224 = vector.extract_strided_slice %219 {offsets = [0, 96], sizes = [2, 32], strides = [1, 1]} : vector<2x128xf32> to vector<2x32xf32>
    %225 = arith.mulf %222, %188 : vector<2x32xf32>
    %226 = arith.mulf %221, %223 : vector<2x32xf32>
    %227 = arith.addf %225, %226 : vector<2x32xf32>
    %228 = math.tanh %227 : vector<2x32xf32>
    %229 = arith.mulf %224, %228 : vector<2x32xf32>
    %cst_43 = arith.constant 0.000000e+00 : f32
    %230 = vector.broadcast %cst_43 : f32 to vector<2x32xf32>
    %231 = arith.maximumf %229, %230 : vector<2x32xf32>
    %232 = tpu.concatenate %231, %211 in 1 : vector<2x32xf32>, vector<2x32xf32> -> vector<2x64xf32>
    %cst_44 = arith.constant dense<0.000000e+00> : vector<2x128xf32>
    %233 = tpu.matmul %232, %2, %cst_44 {dimension_numbers = #tpu.dot_dimension_numbers<[1], [0], [0], [1], [0, 0, 1, 1], [], []>} : vector<2x64xf32>, vector<64x128xf32>, vector<2x128xf32> -> vector<2x128xf32>
    %234 = vector.broadcast %5 : vector<1x128xf32> to vector<2x128xf32>
    %235 = arith.addf %233, %234 : vector<2x128xf32>
    %236 = arith.negf %235 : vector<2x128xf32>
    %237 = math.exp %236 : vector<2x128xf32>
    %cst_45 = arith.constant 1.000000e+00 : f32
    %238 = vector.broadcast %cst_45 : f32 to vector<2x128xf32>
    %239 = arith.addf %238, %237 : vector<2x128xf32>
    %240 = arith.divf %238, %239 : vector<2x128xf32>
    %241 = math.tanh %235 : vector<2x128xf32>
    %242 = vector.extract_strided_slice %240 {offsets = [0, 0], sizes = [2, 32], strides = [1, 1]} : vector<2x128xf32> to vector<2x32xf32>
    %243 = vector.extract_strided_slice %240 {offsets = [0, 32], sizes = [2, 32], strides = [1, 1]} : vector<2x128xf32> to vector<2x32xf32>
    %244 = vector.extract_strided_slice %241 {offsets = [0, 64], sizes = [2, 32], strides = [1, 1]} : vector<2x128xf32> to vector<2x32xf32>
    %245 = vector.extract_strided_slice %240 {offsets = [0, 96], sizes = [2, 32], strides = [1, 1]} : vector<2x128xf32> to vector<2x32xf32>
    %246 = arith.mulf %243, %209 : vector<2x32xf32>
    %247 = arith.mulf %242, %244 : vector<2x32xf32>
    %248 = arith.addf %246, %247 : vector<2x32xf32>
    %249 = math.tanh %248 : vector<2x32xf32>
    %250 = arith.mulf %245, %249 : vector<2x32xf32>
    %c10 = arith.constant 10 : index
    %c0_46 = arith.constant 0 : index
    %251 = vector.load %arg4[%c10, %c0_46] : memref<16x32xf32, #tpu.memory_space<vmem>>, vector<2x32xf32>
    tpu.vector_store %arg4[%c10, %c0_46], %250 {strides = array<i32>} : memref<16x32xf32, #tpu.memory_space<vmem>>, vector<2x32xf32>,
    %cst_47 = arith.constant dense<0.000000e+00> : vector<2x128xf32>
    %252 = tpu.matmul %229, %1, %cst_47 {dimension_numbers = #tpu.dot_dimension_numbers<[1], [0], [0], [1], [0, 0, 1, 1], [], []>} : vector<2x32xf32>, vector<32x128xf32>, vector<2x128xf32> -> vector<2x128xf32>
    %253 = arith.addf %13, %252 : vector<2x128xf32>
    %254 = arith.negf %253 : vector<2x128xf32>
    %255 = math.exp %254 : vector<2x128xf32>
    %cst_48 = arith.constant 1.000000e+00 : f32
    %256 = vector.broadcast %cst_48 : f32 to vector<2x128xf32>
    %257 = arith.addf %256, %255 : vector<2x128xf32>
    %258 = arith.divf %256, %257 : vector<2x128xf32>
    %259 = math.tanh %253 : vector<2x128xf32>
    %260 = vector.extract_strided_slice %258 {offsets = [0, 0], sizes = [2, 32], strides = [1, 1]} : vector<2x128xf32> to vector<2x32xf32>
    %261 = vector.extract_strided_slice %258 {offsets = [0, 32], sizes = [2, 32], strides = [1, 1]} : vector<2x128xf32> to vector<2x32xf32>
    %262 = vector.extract_strided_slice %259 {offsets = [0, 64], sizes = [2, 32], strides = [1, 1]} : vector<2x128xf32> to vector<2x32xf32>
    %263 = vector.extract_strided_slice %258 {offsets = [0, 96], sizes = [2, 32], strides = [1, 1]} : vector<2x128xf32> to vector<2x32xf32>
    %264 = arith.mulf %261, %227 : vector<2x32xf32>
    %265 = arith.mulf %260, %262 : vector<2x32xf32>
    %266 = arith.addf %264, %265 : vector<2x32xf32>
    %267 = math.tanh %266 : vector<2x32xf32>
    %268 = arith.mulf %263, %267 : vector<2x32xf32>
    %cst_49 = arith.constant 0.000000e+00 : f32
    %269 = vector.broadcast %cst_49 : f32 to vector<2x32xf32>
    %270 = arith.maximumf %268, %269 : vector<2x32xf32>
    %271 = tpu.concatenate %270, %250 in 1 : vector<2x32xf32>, vector<2x32xf32> -> vector<2x64xf32>
    %cst_50 = arith.constant dense<0.000000e+00> : vector<2x128xf32>
    %272 = tpu.matmul %271, %2, %cst_50 {dimension_numbers = #tpu.dot_dimension_numbers<[1], [0], [0], [1], [0, 0, 1, 1], [], []>} : vector<2x64xf32>, vector<64x128xf32>, vector<2x128xf32> -> vector<2x128xf32>
    %273 = vector.broadcast %5 : vector<1x128xf32> to vector<2x128xf32>
    %274 = arith.addf %272, %273 : vector<2x128xf32>
    %275 = arith.negf %274 : vector<2x128xf32>
    %276 = math.exp %275 : vector<2x128xf32>
    %cst_51 = arith.constant 1.000000e+00 : f32
    %277 = vector.broadcast %cst_51 : f32 to vector<2x128xf32>
    %278 = arith.addf %277, %276 : vector<2x128xf32>
    %279 = arith.divf %277, %278 : vector<2x128xf32>
    %280 = math.tanh %274 : vector<2x128xf32>
    %281 = vector.extract_strided_slice %279 {offsets = [0, 0], sizes = [2, 32], strides = [1, 1]} : vector<2x128xf32> to vector<2x32xf32>
    %282 = vector.extract_strided_slice %279 {offsets = [0, 32], sizes = [2, 32], strides = [1, 1]} : vector<2x128xf32> to vector<2x32xf32>
    %283 = vector.extract_strided_slice %280 {offsets = [0, 64], sizes = [2, 32], strides = [1, 1]} : vector<2x128xf32> to vector<2x32xf32>
    %284 = vector.extract_strided_slice %279 {offsets = [0, 96], sizes = [2, 32], strides = [1, 1]} : vector<2x128xf32> to vector<2x32xf32>
    %285 = arith.mulf %282, %248 : vector<2x32xf32>
    %286 = arith.mulf %281, %283 : vector<2x32xf32>
    %287 = arith.addf %285, %286 : vector<2x32xf32>
    %288 = math.tanh %287 : vector<2x32xf32>
    %289 = arith.mulf %284, %288 : vector<2x32xf32>
    %c12 = arith.constant 12 : index
    %c0_52 = arith.constant 0 : index
    %290 = vector.load %arg4[%c12, %c0_52] : memref<16x32xf32, #tpu.memory_space<vmem>>, vector<2x32xf32>
    tpu.vector_store %arg4[%c12, %c0_52], %289 {strides = array<i32>} : memref<16x32xf32, #tpu.memory_space<vmem>>, vector<2x32xf32>,
    %cst_53 = arith.constant dense<0.000000e+00> : vector<2x128xf32>
    %291 = tpu.matmul %268, %1, %cst_53 {dimension_numbers = #tpu.dot_dimension_numbers<[1], [0], [0], [1], [0, 0, 1, 1], [], []>} : vector<2x32xf32>, vector<32x128xf32>, vector<2x128xf32> -> vector<2x128xf32>
    %292 = arith.addf %16, %291 : vector<2x128xf32>
    %293 = arith.negf %292 : vector<2x128xf32>
    %294 = math.exp %293 : vector<2x128xf32>
    %cst_54 = arith.constant 1.000000e+00 : f32
    %295 = vector.broadcast %cst_54 : f32 to vector<2x128xf32>
    %296 = arith.addf %295, %294 : vector<2x128xf32>
    %297 = arith.divf %295, %296 : vector<2x128xf32>
    %298 = math.tanh %292 : vector<2x128xf32>
    %299 = vector.extract_strided_slice %297 {offsets = [0, 0], sizes = [2, 32], strides = [1, 1]} : vector<2x128xf32> to vector<2x32xf32>
    %300 = vector.extract_strided_slice %297 {offsets = [0, 32], sizes = [2, 32], strides = [1, 1]} : vector<2x128xf32> to vector<2x32xf32>
    %301 = vector.extract_strided_slice %298 {offsets = [0, 64], sizes = [2, 32], strides = [1, 1]} : vector<2x128xf32> to vector<2x32xf32>
    %302 = vector.extract_strided_slice %297 {offsets = [0, 96], sizes = [2, 32], strides = [1, 1]} : vector<2x128xf32> to vector<2x32xf32>
    %303 = arith.mulf %300, %266 : vector<2x32xf32>
    %304 = arith.mulf %299, %301 : vector<2x32xf32>
    %305 = arith.addf %303, %304 : vector<2x32xf32>
    %306 = math.tanh %305 : vector<2x32xf32>
    %307 = arith.mulf %302, %306 : vector<2x32xf32>
    %cst_55 = arith.constant 0.000000e+00 : f32
    %308 = vector.broadcast %cst_55 : f32 to vector<2x32xf32>
    %309 = arith.maximumf %307, %308 : vector<2x32xf32>
    %310 = tpu.concatenate %309, %289 in 1 : vector<2x32xf32>, vector<2x32xf32> -> vector<2x64xf32>
    %cst_56 = arith.constant dense<0.000000e+00> : vector<2x128xf32>
    %311 = tpu.matmul %310, %2, %cst_56 {dimension_numbers = #tpu.dot_dimension_numbers<[1], [0], [0], [1], [0, 0, 1, 1], [], []>} : vector<2x64xf32>, vector<64x128xf32>, vector<2x128xf32> -> vector<2x128xf32>
    %312 = vector.broadcast %5 : vector<1x128xf32> to vector<2x128xf32>
    %313 = arith.addf %311, %312 : vector<2x128xf32>
    %314 = arith.negf %313 : vector<2x128xf32>
    %315 = math.exp %314 : vector<2x128xf32>
    %cst_57 = arith.constant 1.000000e+00 : f32
    %316 = vector.broadcast %cst_57 : f32 to vector<2x128xf32>
    %317 = arith.addf %316, %315 : vector<2x128xf32>
    %318 = arith.divf %316, %317 : vector<2x128xf32>
    %319 = math.tanh %313 : vector<2x128xf32>
    %320 = vector.extract_strided_slice %318 {offsets = [0, 0], sizes = [2, 32], strides = [1, 1]} : vector<2x128xf32> to vector<2x32xf32>
    %321 = vector.extract_strided_slice %318 {offsets = [0, 32], sizes = [2, 32], strides = [1, 1]} : vector<2x128xf32> to vector<2x32xf32>
    %322 = vector.extract_strided_slice %319 {offsets = [0, 64], sizes = [2, 32], strides = [1, 1]} : vector<2x128xf32> to vector<2x32xf32>
    %323 = vector.extract_strided_slice %318 {offsets = [0, 96], sizes = [2, 32], strides = [1, 1]} : vector<2x128xf32> to vector<2x32xf32>
    %324 = arith.mulf %321, %287 : vector<2x32xf32>
    %325 = arith.mulf %320, %322 : vector<2x32xf32>
    %326 = arith.addf %324, %325 : vector<2x32xf32>
    %327 = math.tanh %326 : vector<2x32xf32>
    %328 = arith.mulf %323, %327 : vector<2x32xf32>
    %c14 = arith.constant 14 : index
    %c0_58 = arith.constant 0 : index
    %329 = vector.load %arg4[%c14, %c0_58] : memref<16x32xf32, #tpu.memory_space<vmem>>, vector<2x32xf32>
    tpu.vector_store %arg4[%c14, %c0_58], %328 {strides = array<i32>} : memref<16x32xf32, #tpu.memory_space<vmem>>, vector<2x32xf32>,
    %c0_59 = arith.constant 0 : index
    %c0_60 = arith.constant 0 : index
    %330 = vector.load %arg4[%c0_59, %c0_60] : memref<16x32xf32, #tpu.memory_space<vmem>>, vector<16x32xf32>
    %cst_61 = arith.constant dense<0.000000e+00> : vector<16x128xf32>
    %331 = tpu.matmul %330, %3, %cst_61 {dimension_numbers = #tpu.dot_dimension_numbers<[1], [0], [0], [1], [0, 0, 1, 1], [], []>} : vector<16x32xf32>, vector<32x128xf32>, vector<16x128xf32> -> vector<16x128xf32>
    %332 = vector.broadcast %6 : vector<1x128xf32> to vector<16x128xf32>
    %333 = arith.addf %331, %332 : vector<16x128xf32>
    %c0_62 = arith.constant 0 : index
    %c0_63 = arith.constant 0 : index
    %334 = vector.load %arg3[%c0_62, %c0_63] : memref<16x128xf32, #tpu.memory_space<vmem>>, vector<16x128xf32>
    tpu.vector_store %arg3[%c0_62, %c0_63], %333 {strides = array<i32>} : memref<16x128xf32, #tpu.memory_space<vmem>>, vector<16x128xf32>,
    return
  }
  func.func @transform_0(%arg0: i32) -> (i32, i32) {
    %c0_i32 = arith.constant 0 : i32
    %c0_i32_0 = arith.constant 0 : i32
    %c0_i32_1 = arith.constant 0 : i32
    return %c0_i32, %c0_i32_0 : i32, i32
  }
  func.func @transform_1(%arg0: i32) -> (i32, i32) {
    %c0_i32 = arith.constant 0 : i32
    %c0_i32_0 = arith.constant 0 : i32
    %c0_i32_1 = arith.constant 0 : i32
    return %c0_i32, %c0_i32_0 : i32, i32
  }
  func.func @transform_2(%arg0: i32) -> (i32, i32) {
    %c0_i32 = arith.constant 0 : i32
    %c0_i32_0 = arith.constant 0 : i32
    %c0_i32_1 = arith.constant 0 : i32
    return %c0_i32, %c0_i32_0 : i32, i32
  }
}

</mosaic_0001>

<llo_original>
// kernel: lstm_decoder_forward.1
$region0: #{lstm_decoder_forward.1}
  #allocation0 [shape = 'u32[]', space=smem, size = 0x4, offset = 0x4, fixed_abs, tag = 'smem constant byte address 0x4 - core index']
  #allocation1 [shape = 'u32[144,128]{1,0:T(1,128)}', space=vmem, size = 0x12000, scoped, tag = 'internal scratch']
  #allocation2 [shape = 'f32[16,32]{1,0:T(8,128)}', space=vmem, size = 0x2000, scoped, tag = 'scratch operand']
  %s0 = inlined_call_operand.hbm [shape: f32[2,32], index: 0, kind: input, shape index: {}]
  %s1 = inlined_call_operand.hbm [shape: f32[168,128], index: 1, kind: input, shape index: {}]
  %s2 = inlined_call_operand.vmem [shape: f32[16,128], index: 2, kind: output, shape index: {}]
  %s3 = sld [smem:[#allocation0]]
  $region26: #{lstm_decoder_forward.1} parent=0
    _
  %s5 = ssub.s32 1, %s3
  %s6 = scalar_select 0, %s5, %s3
  $region1: #{lstm_decoder_forward.1} parent=0
    #allocation3 [shape = 'u8[1024]{0}', space=vmem, size = 0x400, scoped, tag = 'input window, operand 0, single buffered']
    #allocation4 [shape = 's32[1]{0}', space=sflag, size = 0x4, scoped, tag = 'scoped memory for lstm_decoder_forward.1']
    #allocation5 [shape = 'u8[86016]{0}', space=vmem, size = 0x15000, scoped, tag = 'input window, operand 1, single buffered']
    #allocation6 [shape = 's32[1]{0}', space=sflag, size = 0x4, scoped, tag = 'scoped memory for lstm_decoder_forward.1']
    %7 = vsyncpa [#allocation4], 0
    %8 = vsyncpa [#allocation6], 0
    // Predicated region
    $region2: #{lstm_decoder_forward.1} parent=1 // pred_check
      _
    $region3: #{lstm_decoder_forward.1} parent=1 // pred_check_branch
      %10 = sbr.rel (0) target = $region5
    $region4: #{lstm_decoder_forward.1} parent=1 // pred_region
      %s12 = ssub.s32 32, 32
      %13 = vsyncadd [#allocation4], %s12
      %s15 = sshll.u32 [#allocation3], 4
      %s16 = int_to_ptr.vmem [resolvable:$true] %s15
      %18 = dma.hbm_to_vmem [thread:$0]  %s0, 32, %s16, [#allocation4]
    $region5: #{lstm_decoder_forward.1} parent=1 // pred_fallthru
      _
    // Predicated region
    $region6: #{lstm_decoder_forward.1} parent=1 // pred_check
      _
    $region7: #{lstm_decoder_forward.1} parent=1 // pred_check_branch
      %20 = sbr.rel (0) target = $region9
    $region8: #{lstm_decoder_forward.1} parent=1 // pred_region
      %s22 = ssub.s32 2688, 2688
      %23 = vsyncadd [#allocation6], %s22
      %s24 = sshll.u32 [#allocation5], 4
      %s25 = int_to_ptr.vmem [resolvable:$true] %s24
      %30 = dma.hbm_to_vmem [thread:$0]  %s1, 2688, %s25, [#allocation6], 128, 128, 8
    $region9: #{lstm_decoder_forward.1} parent=1 // pred_fallthru
      _
    // Predicated region
    $region10: #{lstm_decoder_forward.1} parent=1 // pred_check
      _
    $region11: #{lstm_decoder_forward.1} parent=1 // pred_check_branch
      %32 = sbr.rel (0) target = $region13
    $region12: #{lstm_decoder_forward.1} parent=1 // pred_region
      %33 = dma.done [#allocation4], 32
    $region13: #{lstm_decoder_forward.1} parent=1 // pred_fallthru
      _
    // Predicated region
    $region14: #{lstm_decoder_forward.1} parent=1 // pred_check
      _
    $region15: #{lstm_decoder_forward.1} parent=1 // pred_check_branch
      %35 = sbr.rel (0) target = $region17
    $region16: #{lstm_decoder_forward.1} parent=1 // pred_region
      %36 = dma.done [#allocation6], 2688
    $region17: #{lstm_decoder_forward.1} parent=1 // pred_fallthru
      _
    %v37 = vld [vmem:[#allocation5] sm:$0xff]
    %v38 = vld [vmem:[#allocation5 + $0x8] sm:$0xff]
    %v39 = vld [vmem:[#allocation5 + $0x10] sm:$0xff]
    %v40 = vld [vmem:[#allocation5 + $0x18] sm:$0xff]
    %v41 = vld [vmem:[#allocation5 + $0x20] sm:$0xff]
    %v42 = vld [vmem:[#allocation5 + $0x28] sm:$0xff]
    %v43 = vld [vmem:[#allocation5 + $0x30] sm:$0xff]
    %v44 = vld [vmem:[#allocation5 + $0x38] sm:$0xff]
    %v45 = vld [vmem:[#allocation5 + $0x40] sm:$0xff]
    %v46 = vld [vmem:[#allocation5 + $0x48] sm:$0xff]
    %v47 = vld [vmem:[#allocation5 + $0x50] sm:$0xff]
    %v48 = vld [vmem:[#allocation5 + $0x58] sm:$0xff]
    %v49 = vld [vmem:[#allocation5 + $0x60] sm:$0xff]
    %v50 = vld [vmem:[#allocation5 + $0x68] sm:$0xff]
    %v51 = vld [vmem:[#allocation5 + $0x70] sm:$0xff]
    %v52 = vld [vmem:[#allocation5 + $0x78] sm:$0xff]
    %v53 = vld [vmem:[#allocation5 + $0x80] sm:$0xff]
    %v54 = vld [vmem:[#allocation5 + $0x88] sm:$0xff]
    %v55 = vld [vmem:[#allocation5 + $0x90] sm:$0xff]
    %v56 = vld [vmem:[#allocation5 + $0x98] sm:$0xff]
    %v57 = vld [vmem:[#allocation5 + $0xa0] sm:$0x1]
    %v58 = vld [vmem:[#allocation5 + $0xa1] sm:$0x1]
    %v59 = vld [vmem:[#allocation5 + $0xa2] sm:$0x1]
    %v60 = vld [vmem:[#allocation3] sm:$0x3]
    %v61 = vlaneseq
    %v62 = vshrl.u32 %v61, 7
    %v63 = vsub.s32 0, %v62
    %v64 = vrot.slane %v57, %v63
    %vm65 = vcmask 261120
    %v67 = vsel %vm65, %v60, 0
    %69 = vmatprep.subr.mxu0 0.0
    %70 = vmatpush1.msra.mxu0 %v37
    %71 = vmatprep.subr.mxu0 0.0
    %72 = vmatpush1.msra.mxu0 %v38
    %73 = vmatprep.subr.mxu0 0.0
    %74 = vmatpush1.msra.mxu0 %v39
    %75 = vmatprep.subr.mxu0 0.0
    %76 = vmatpush1.msra.mxu0 %v40
    %77 = vmatprep.subr.mxu0 0.0
    %78 = vmatpush1.msra.mxu0 0.0
    %79 = vmatprep.subr.mxu0 0.0
    %80 = vmatpush1.msra.mxu0 0.0
    %81 = vmatprep.subr.mxu0 0.0
    %82 = vmatpush1.msra.mxu0 0.0
    %83 = vmatprep.subr.mxu0 0.0
    %84 = vmatpush1.msra.mxu0 0.0
    %85 = vmatprep.subr.mxu0 0.0
    %86 = vmatpush1.msra.mxu0 0.0
    %87 = vmatprep.subr.mxu0 0.0
    %88 = vmatpush1.msra.mxu0 0.0
    %89 = vmatprep.subr.mxu0 0.0
    %90 = vmatpush1.msra.mxu0 0.0
    %91 = vmatprep.subr.mxu0 0.0
    %92 = vmatpush1.msra.mxu0 0.0
    %93 = vmatprep.subr.mxu0 0.0
    %94 = vmatpush1.msra.mxu0 0.0
    %95 = vmatprep.subr.mxu0 0.0
    %96 = vmatpush1.msra.mxu0 0.0
    %97 = vmatprep.subr.mxu0 0.0
    %98 = vmatpush1.msra.mxu0 0.0
    %99 = vmatprep.subr.mxu0 0.0
    %100 = vmatpush1.msra.mxu0 0.0
    %101 = vmatprep.subr.mxu0 0.0
    %102 = vmatpush1.msra.mxu0 0.0
    %103 = vmatprep.subr.mxu0 0.0
    %104 = vmatpush1.msra.mxu0 0.0
    %105 = vmatprep.subr.mxu0 0.0
    %106 = vmatpush1.msra.mxu0 0.0
    %107 = vmatprep.subr.mxu0 0.0
    %108 = vmatpush1.msra.mxu0 0.0
    %109 = vmatprep.subr.mxu0 0.0
    %110 = vmatpush1.msra.mxu0 0.0
    %111 = vmatprep.subr.mxu0 0.0
    %112 = vmatpush1.msra.mxu0 0.0
    %113 = vmatprep.subr.mxu0 0.0
    %114 = vmatpush1.msra.mxu0 0.0
    %115 = vmatprep.subr.mxu0 0.0
    %116 = vmatpush1.msra.mxu0 0.0
    %117 = vmatprep.subr.mxu0 0.0
    %118 = vmatpush1.msra.mxu0 0.0
    %119 = vmatprep.subr.mxu0 0.0
    %120 = vmatpush1.msra.mxu0 0.0
    %121 = vmatprep.subr.mxu0 0.0
    %122 = vmatpush1.msra.mxu0 0.0
    %123 = vmatprep.subr.mxu0 0.0
    %124 = vmatpush1.msra.mxu0 0.0
    %125 = vmatprep.subr.mxu0 0.0
    %126 = vmatpush1.msra.mxu0 0.0
    %127 = vmatprep.subr.mxu0 0.0
    %128 = vmatpush1.msra.mxu0 0.0
    %129 = vmatprep.subr.mxu0 0.0
    %130 = vmatpush1.msra.mxu0 0.0
    %131 = vmatprep.subr.mxu0 0.0
    %132 = vmatpush1.msra.mxu0 0.0
    %133 = vmatprep.mubr.f32.mxu0 0.0
    %134 = vmatmul.mubr.f32.gmra.mrb[0].mxu0 %v67
    %v135 = vpop.f32.mrb[0].mxu0
    %v136 = vadd.f32 %v64, %v135
    %v137 = vpop.f32.mrb[0].mxu0
    %138 = vdwg.mxu0
    %v139 = vlaneseq
    %v140 = vshrl.u32 %v139, 7
    %v141 = vsub.s32 0, %v140
    %v142 = vrot.slane %v136, %v141
    %v143 = vlaneseq
    %v144 = vshrl.u32 %v143, 7
    %v145 = vsub.s32 1, %v144
    %v146 = vrot.slane %v136, %v145
    %v148 = vsel %vm65, 0.0, 0
    %150 = vmatprep.subr.mxu0 0.0
    %151 = vmatpush1.msra.mxu0 %v41
    %152 = vmatprep.subr.mxu0 0.0
    %153 = vmatpush1.msra.mxu0 %v42
    %154 = vmatprep.subr.mxu0 0.0
    %155 = vmatpush1.msra.mxu0 %v43
    %156 = vmatprep.subr.mxu0 0.0
    %157 = vmatpush1.msra.mxu0 %v44
    %158 = vmatprep.subr.mxu0 0.0
    %159 = vmatpush1.msra.mxu0 0.0
    %160 = vmatprep.subr.mxu0 0.0
    %161 = vmatpush1.msra.mxu0 0.0
    %162 = vmatprep.subr.mxu0 0.0
    %163 = vmatpush1.msra.mxu0 0.0
    %164 = vmatprep.subr.mxu0 0.0
    %165 = vmatpush1.msra.mxu0 0.0
    %166 = vmatprep.subr.mxu0 0.0
    %167 = vmatpush1.msra.mxu0 0.0
    %168 = vmatprep.subr.mxu0 0.0
    %169 = vmatpush1.msra.mxu0 0.0
    %170 = vmatprep.subr.mxu0 0.0
    %171 = vmatpush1.msra.mxu0 0.0
    %172 = vmatprep.subr.mxu0 0.0
    %173 = vmatpush1.msra.mxu0 0.0
    %174 = vmatprep.subr.mxu0 0.0
    %175 = vmatpush1.msra.mxu0 0.0
    %176 = vmatprep.subr.mxu0 0.0
    %177 = vmatpush1.msra.mxu0 0.0
    %178 = vmatprep.subr.mxu0 0.0
    %179 = vmatpush1.msra.mxu0 0.0
    %180 = vmatprep.subr.mxu0 0.0
    %181 = vmatpush1.msra.mxu0 0.0
    %182 = vmatprep.subr.mxu0 0.0
    %183 = vmatpush1.msra.mxu0 0.0
    %184 = vmatprep.subr.mxu0 0.0
    %185 = vmatpush1.msra.mxu0 0.0
    %186 = vmatprep.subr.mxu0 0.0
    %187 = vmatpush1.msra.mxu0 0.0
    %188 = vmatprep.subr.mxu0 0.0
    %189 = vmatpush1.msra.mxu0 0.0
    %190 = vmatprep.subr.mxu0 0.0
    %191 = vmatpush1.msra.mxu0 0.0
    %192 = vmatprep.subr.mxu0 0.0
    %193 = vmatpush1.msra.mxu0 0.0
    %194 = vmatprep.subr.mxu0 0.0
    %195 = vmatpush1.msra.mxu0 0.0
    %196 = vmatprep.subr.mxu0 0.0
    %197 = vmatpush1.msra.mxu0 0.0
    %198 = vmatprep.subr.mxu0 0.0
    %199 = vmatpush1.msra.mxu0 0.0
    %200 = vmatprep.subr.mxu0 0.0
    %201 = vmatpush1.msra.mxu0 0.0
    %202 = vmatprep.subr.mxu0 0.0
    %203 = vmatpush1.msra.mxu0 0.0
    %204 = vmatprep.subr.mxu0 0.0
    %205 = vmatpush1.msra.mxu0 0.0
    %206 = vmatprep.subr.mxu0 0.0
    %207 = vmatpush1.msra.mxu0 0.0
    %208 = vmatprep.subr.mxu0 0.0
    %209 = vmatpush1.msra.mxu0 0.0
    %210 = vmatprep.subr.mxu0 0.0
    %211 = vmatpush1.msra.mxu0 0.0
    %212 = vmatprep.subr.mxu0 0.0
    %213 = vmatpush1.msra.mxu0 0.0
    %214 = vmatprep.mubr.f32.mxu0 0.0
    %215 = vmatmul.mubr.f32.gmra.mrb[0].mxu0 %v148
    %v216 = vpop.f32.mrb[0].mxu0
    %v217 = vadd.f32 0.0, %v216
    %v218 = vpop.f32.mrb[0].mxu0
    %219 = vdwg.mxu0
    %v220 = vadd.f32 %v142, %v217
    %v221 = vxor.u32 %v220, 2147483648
    %v222 = vmul.f32 %v221, 1.442695
    %v223 = vpow.pop %v222
    %v224 = vadd.f32 %v223, 1.0
    %v225 = vrcp.pop %v224
    %v226 = vmul.f32 1.0, %v225
    %v227 = vtanh.pop %v220
    %v228 = vmul.f32 %v226, 0.0
    %230 = vrot.lane.b32.xlu0 %v227, 64
    %v231 = vpop.permute.xlu0 %230
    %v233 = vmul.f32 %v226, %v231
    %235 = vrot.lane.b32.xlu0 %v233, 32
    %v236 = vpop.permute.xlu0 %235
    %v238 = vadd.f32 %v228, %v236
    %v239 = vtanh.pop %v238
    %241 = vrot.lane.b32.xlu0 %v239, 64
    %v242 = vpop.permute.xlu0 %241
    %v244 = vmul.f32 %v226, %v242
    %v245 = vmax.f32 %v244, 0.0
    %247 = vrot.lane.b32.xlu0 %v245, 32
    %v248 = vpop.permute.xlu0 %247
    %v250 = vsel %vm65, %v248, 0.0
    %v251 = vlaneseq
    %v252 = vshrl.u32 %v251, 7
    %v253 = vsub.s32 0, %v252
    %v254 = vrot.slane %v58, %v253
    %vm255 = vcmask 523264
    %v257 = vsel %vm255, %v250, 0
    %259 = vmatprep.subr.mxu0 0.0
    %260 = vmatpush1.msra.mxu0 %v45
    %261 = vmatprep.subr.mxu0 0.0
    %262 = vmatpush1.msra.mxu0 %v46
    %263 = vmatprep.subr.mxu0 0.0
    %264 = vmatpush1.msra.mxu0 %v47
    %265 = vmatprep.subr.mxu0 0.0
    %266 = vmatpush1.msra.mxu0 %v48
    %267 = vmatprep.subr.mxu0 0.0
    %268 = vmatpush1.msra.mxu0 %v49
    %269 = vmatprep.subr.mxu0 0.0
    %270 = vmatpush1.msra.mxu0 %v50
    %271 = vmatprep.subr.mxu0 0.0
    %272 = vmatpush1.msra.mxu0 %v51
    %273 = vmatprep.subr.mxu0 0.0
    %274 = vmatpush1.msra.mxu0 %v52
    %275 = vmatprep.subr.mxu0 0.0
    %276 = vmatpush1.msra.mxu0 0.0
    %277 = vmatprep.subr.mxu0 0.0
    %278 = vmatpush1.msra.mxu0 0.0
    %279 = vmatprep.subr.mxu0 0.0
    %280 = vmatpush1.msra.mxu0 0.0
    %281 = vmatprep.subr.mxu0 0.0
    %282 = vmatpush1.msra.mxu0 0.0
    %283 = vmatprep.subr.mxu0 0.0
    %284 = vmatpush1.msra.mxu0 0.0
    %285 = vmatprep.subr.mxu0 0.0
    %286 = vmatpush1.msra.mxu0 0.0
    %287 = vmatprep.subr.mxu0 0.0
    %288 = vmatpush1.msra.mxu0 0.0
    %289 = vmatprep.subr.mxu0 0.0
    %290 = vmatpush1.msra.mxu0 0.0
    %291 = vmatprep.subr.mxu0 0.0
    %292 = vmatpush1.msra.mxu0 0.0
    %293 = vmatprep.subr.mxu0 0.0
    %294 = vmatpush1.msra.mxu0 0.0
    %295 = vmatprep.subr.mxu0 0.0
    %296 = vmatpush1.msra.mxu0 0.0
    %297 = vmatprep.subr.mxu0 0.0
    %298 = vmatpush1.msra.mxu0 0.0
    %299 = vmatprep.subr.mxu0 0.0
    %300 = vmatpush1.msra.mxu0 0.0
    %301 = vmatprep.subr.mxu0 0.0
    %302 = vmatpush1.msra.mxu0 0.0
    %303 = vmatprep.subr.mxu0 0.0
    %304 = vmatpush1.msra.mxu0 0.0
    %305 = vmatprep.subr.mxu0 0.0
    %306 = vmatpush1.msra.mxu0 0.0
    %307 = vmatprep.subr.mxu0 0.0
    %308 = vmatpush1.msra.mxu0 0.0
    %309 = vmatprep.subr.mxu0 0.0
    %310 = vmatpush1.msra.mxu0 0.0
    %311 = vmatprep.subr.mxu0 0.0
    %312 = vmatpush1.msra.mxu0 0.0
    %313 = vmatprep.subr.mxu0 0.0
    %314 = vmatpush1.msra.mxu0 0.0
    %315 = vmatprep.subr.mxu0 0.0
    %316 = vmatpush1.msra.mxu0 0.0
    %317 = vmatprep.subr.mxu0 0.0
    %318 = vmatpush1.msra.mxu0 0.0
    %319 = vmatprep.subr.mxu0 0.0
    %320 = vmatpush1.msra.mxu0 0.0
    %321 = vmatprep.subr.mxu0 0.0
    %322 = vmatpush1.msra.mxu0 0.0
    %323 = vmatprep.mubr.f32.mxu0 0.0
    %324 = vmatmul.mubr.f32.gmra.mrb[0].mxu0 %v257
    %v325 = vpop.f32.mrb[0].mxu0
    %v326 = vadd.f32 %v254, %v325
    %v327 = vpop.f32.mrb[0].mxu0
    %328 = vdwg.mxu0
    %v329 = vxor.u32 %v326, 2147483648
    %v330 = vmul.f32 %v329, 1.442695
    %v331 = vpow.pop %v330
    %v332 = vadd.f32 %v331, 1.0
    %v333 = vrcp.pop %v332
    %v334 = vmul.f32 1.0, %v333
    %v335 = vtanh.pop %v326
    %v336 = vmul.f32 %v334, 0.0
    %338 = vrot.lane.b32.xlu0 %v335, 64
    %v339 = vpop.permute.xlu0 %338
    %v341 = vmul.f32 %v334, %v339
    %343 = vrot.lane.b32.xlu0 %v341, 32
    %v344 = vpop.permute.xlu0 %343
    %v346 = vadd.f32 %v336, %v344
    %v347 = vtanh.pop %v346
    %349 = vrot.lane.b32.xlu0 %v347, 64
    %v350 = vpop.permute.xlu0 %349
    %v352 = vmul.f32 %v334, %v350
    %354 = vrot.lane.b32.xlu0 %v352, 32
    %v355 = vpop.permute.xlu0 %354
    %vm357 = vcmask 254976
    %358 = vst.msk [vmem:[#allocation2] sm:$0x3] %vm357, %v355
    %360 = vrot.lane.b32.xlu0 %v244, 32
    %v361 = vpop.permute.xlu0 %360
    %v362 = vsel %vm65, %v361, 0
    %364 = vmatprep.subr.mxu0 0.0
    %365 = vmatpush1.msra.mxu0 %v41
    %366 = vmatprep.subr.mxu0 0.0
    %367 = vmatpush1.msra.mxu0 %v42
    %368 = vmatprep.subr.mxu0 0.0
    %369 = vmatpush1.msra.mxu0 %v43
    %370 = vmatprep.subr.mxu0 0.0
    %371 = vmatpush1.msra.mxu0 %v44
    %372 = vmatprep.subr.mxu0 0.0
    %373 = vmatpush1.msra.mxu0 0.0
    %374 = vmatprep.subr.mxu0 0.0
    %375 = vmatpush1.msra.mxu0 0.0
    %376 = vmatprep.subr.mxu0 0.0
    %377 = vmatpush1.msra.mxu0 0.0
    %378 = vmatprep.subr.mxu0 0.0
    %379 = vmatpush1.msra.mxu0 0.0
    %380 = vmatprep.subr.mxu0 0.0
    %381 = vmatpush1.msra.mxu0 0.0
    %382 = vmatprep.subr.mxu0 0.0
    %383 = vmatpush1.msra.mxu0 0.0
    %384 = vmatprep.subr.mxu0 0.0
    %385 = vmatpush1.msra.mxu0 0.0
    %386 = vmatprep.subr.mxu0 0.0
    %387 = vmatpush1.msra.mxu0 0.0
    %388 = vmatprep.subr.mxu0 0.0
    %389 = vmatpush1.msra.mxu0 0.0
    %390 = vmatprep.subr.mxu0 0.0
    %391 = vmatpush1.msra.mxu0 0.0
    %392 = vmatprep.subr.mxu0 0.0
    %393 = vmatpush1.msra.mxu0 0.0
    %394 = vmatprep.subr.mxu0 0.0
    %395 = vmatpush1.msra.mxu0 0.0
    %396 = vmatprep.subr.mxu0 0.0
    %397 = vmatpush1.msra.mxu0 0.0
    %398 = vmatprep.subr.mxu0 0.0
    %399 = vmatpush1.msra.mxu0 0.0
    %400 = vmatprep.subr.mxu0 0.0
    %401 = vmatpush1.msra.mxu0 0.0
    %402 = vmatprep.subr.mxu0 0.0
    %403 = vmatpush1.msra.mxu0 0.0
    %404 = vmatprep.subr.mxu0 0.0
    %405 = vmatpush1.msra.mxu0 0.0
    %406 = vmatprep.subr.mxu0 0.0
    %407 = vmatpush1.msra.mxu0 0.0
    %408 = vmatprep.subr.mxu0 0.0
    %409 = vmatpush1.msra.mxu0 0.0
    %410 = vmatprep.subr.mxu0 0.0
    %411 = vmatpush1.msra.mxu0 0.0
    %412 = vmatprep.subr.mxu0 0.0
    %413 = vmatpush1.msra.mxu0 0.0
    %414 = vmatprep.subr.mxu0 0.0
    %415 = vmatpush1.msra.mxu0 0.0
    %416 = vmatprep.subr.mxu0 0.0
    %417 = vmatpush1.msra.mxu0 0.0
    %418 = vmatprep.subr.mxu0 0.0
    %419 = vmatpush1.msra.mxu0 0.0
    %420 = vmatprep.subr.mxu0 0.0
    %421 = vmatpush1.msra.mxu0 0.0
    %422 = vmatprep.subr.mxu0 0.0
    %423 = vmatpush1.msra.mxu0 0.0
    %424 = vmatprep.subr.mxu0 0.0
    %425 = vmatpush1.msra.mxu0 0.0
    %426 = vmatprep.subr.mxu0 0.0
    %427 = vmatpush1.msra.mxu0 0.0
    %428 = vmatprep.mubr.f32.mxu0 0.0
    %429 = vmatmul.mubr.f32.gmra.mrb[0].mxu0 %v362
    %v430 = vpop.f32.mrb[0].mxu0
    %v431 = vadd.f32 0.0, %v430
    %v432 = vpop.f32.mrb[0].mxu0
    %433 = vdwg.mxu0
    %v434 = vadd.f32 %v146, %v431
    %v435 = vxor.u32 %v434, 2147483648
    %v436 = vmul.f32 %v435, 1.442695
    %v437 = vpow.pop %v436
    %v438 = vadd.f32 %v437, 1.0
    %v439 = vrcp.pop %v438
    %v440 = vmul.f32 1.0, %v439
    %v441 = vtanh.pop %v434
    %v442 = vmul.f32 %v440, %v238
    %444 = vrot.lane.b32.xlu0 %v441, 64
    %v445 = vpop.permute.xlu0 %444
    %v447 = vmul.f32 %v440, %v445
    %449 = vrot.lane.b32.xlu0 %v447, 32
    %v450 = vpop.permute.xlu0 %449
    %v452 = vadd.f32 %v442, %v450
    %v453 = vtanh.pop %v452
    %455 = vrot.lane.b32.xlu0 %v453, 64
    %v456 = vpop.permute.xlu0 %455
    %v458 = vmul.f32 %v440, %v456
    %v459 = vmax.f32 %v458, 0.0
    %461 = vrot.lane.b32.xlu0 %v459, 32
    %v462 = vpop.permute.xlu0 %461
    %464 = vrot.lane.b32.xlu0 %v352, 64
    %v465 = vpop.permute.xlu0 %464
    %v467 = vsel %vm65, %v462, %v465
    %v469 = vsel %vm255, %v467, 0
    %471 = vmatprep.subr.mxu0 0.0
    %472 = vmatpush1.msra.mxu0 %v45
    %473 = vmatprep.subr.mxu0 0.0
    %474 = vmatpush1.msra.mxu0 %v46
    %475 = vmatprep.subr.mxu0 0.0
    %476 = vmatpush1.msra.mxu0 %v47
    %477 = vmatprep.subr.mxu0 0.0
    %478 = vmatpush1.msra.mxu0 %v48
    %479 = vmatprep.subr.mxu0 0.0
    %480 = vmatpush1.msra.mxu0 %v49
    %481 = vmatprep.subr.mxu0 0.0
    %482 = vmatpush1.msra.mxu0 %v50
    %483 = vmatprep.subr.mxu0 0.0
    %484 = vmatpush1.msra.mxu0 %v51
    %485 = vmatprep.subr.mxu0 0.0
    %486 = vmatpush1.msra.mxu0 %v52
    %487 = vmatprep.subr.mxu0 0.0
    %488 = vmatpush1.msra.mxu0 0.0
    %489 = vmatprep.subr.mxu0 0.0
    %490 = vmatpush1.msra.mxu0 0.0
    %491 = vmatprep.subr.mxu0 0.0
    %492 = vmatpush1.msra.mxu0 0.0
    %493 = vmatprep.subr.mxu0 0.0
    %494 = vmatpush1.msra.mxu0 0.0
    %495 = vmatprep.subr.mxu0 0.0
    %496 = vmatpush1.msra.mxu0 0.0
    %497 = vmatprep.subr.mxu0 0.0
    %498 = vmatpush1.msra.mxu0 0.0
    %499 = vmatprep.subr.mxu0 0.0
    %500 = vmatpush1.msra.mxu0 0.0
    %501 = vmatprep.subr.mxu0 0.0
    %502 = vmatpush1.msra.mxu0 0.0
    %503 = vmatprep.subr.mxu0 0.0
    %504 = vmatpush1.msra.mxu0 0.0
    %505 = vmatprep.subr.mxu0 0.0
    %506 = vmatpush1.msra.mxu0 0.0
    %507 = vmatprep.subr.mxu0 0.0
    %508 = vmatpush1.msra.mxu0 0.0
    %509 = vmatprep.subr.mxu0 0.0
    %510 = vmatpush1.msra.mxu0 0.0
    %511 = vmatprep.subr.mxu0 0.0
    %512 = vmatpush1.msra.mxu0 0.0
    %513 = vmatprep.subr.mxu0 0.0
    %514 = vmatpush1.msra.mxu0 0.0
    %515 = vmatprep.subr.mxu0 0.0
    %516 = vmatpush1.msra.mxu0 0.0
    %517 = vmatprep.subr.mxu0 0.0
    %518 = vmatpush1.msra.mxu0 0.0
    %519 = vmatprep.subr.mxu0 0.0
    %520 = vmatpush1.msra.mxu0 0.0
    %521 = vmatprep.subr.mxu0 0.0
    %522 = vmatpush1.msra.mxu0 0.0
    %523 = vmatprep.subr.mxu0 0.0
    %524 = vmatpush1.msra.mxu0 0.0
    %525 = vmatprep.subr.mxu0 0.0
    %526 = vmatpush1.msra.mxu0 0.0
    %527 = vmatprep.subr.mxu0 0.0
    %528 = vmatpush1.msra.mxu0 0.0
    %529 = vmatprep.subr.mxu0 0.0
    %530 = vmatpush1.msra.mxu0 0.0
    %531 = vmatprep.subr.mxu0 0.0
    %532 = vmatpush1.msra.mxu0 0.0
    %533 = vmatprep.subr.mxu0 0.0
    %534 = vmatpush1.msra.mxu0 0.0
    %535 = vmatprep.mubr.f32.mxu0 0.0
    %536 = vmatmul.mubr.f32.gmra.mrb[0].mxu0 %v469
    %v537 = vpop.f32.mrb[0].mxu0
    %v538 = vadd.f32 %v254, %v537
    %v539 = vpop.f32.mrb[0].mxu0
    %540 = vdwg.mxu0
    %v541 = vxor.u32 %v538, 2147483648
    %v542 = vmul.f32 %v541, 1.442695
    %v543 = vpow.pop %v542
    %v544 = vadd.f32 %v543, 1.0
    %v545 = vrcp.pop %v544
    %v546 = vmul.f32 1.0, %v545
    %v547 = vtanh.pop %v538
    %v548 = vmul.f32 %v546, %v346
    %550 = vrot.lane.b32.xlu0 %v547, 64
    %v551 = vpop.permute.xlu0 %550
    %v553 = vmul.f32 %v546, %v551
    %555 = vrot.lane.b32.xlu0 %v553, 32
    %v556 = vpop.permute.xlu0 %555
    %v558 = vadd.f32 %v548, %v556
    %v559 = vtanh.pop %v558
    %561 = vrot.lane.b32.xlu0 %v559, 64
    %v562 = vpop.permute.xlu0 %561
    %v564 = vmul.f32 %v546, %v562
    %566 = vrot.lane.b32.xlu0 %v564, 32
    %v567 = vpop.permute.xlu0 %566
    %569 = vst.msk [vmem:[#allocation2 + $0x2] sm:$0x3] %vm357, %v567
    %571 = vrot.lane.b32.xlu0 %v458, 32
    %v572 = vpop.permute.xlu0 %571
    %v573 = vsel %vm65, %v572, 0
    %575 = vmatprep.subr.mxu0 0.0
    %576 = vmatpush1.msra.mxu0 %v41
    %577 = vmatprep.subr.mxu0 0.0
    %578 = vmatpush1.msra.mxu0 %v42
    %579 = vmatprep.subr.mxu0 0.0
    %580 = vmatpush1.msra.mxu0 %v43
    %581 = vmatprep.subr.mxu0 0.0
    %582 = vmatpush1.msra.mxu0 %v44
    %583 = vmatprep.subr.mxu0 0.0
    %584 = vmatpush1.msra.mxu0 0.0
    %585 = vmatprep.subr.mxu0 0.0
    %586 = vmatpush1.msra.mxu0 0.0
    %587 = vmatprep.subr.mxu0 0.0
    %588 = vmatpush1.msra.mxu0 0.0
    %589 = vmatprep.subr.mxu0 0.0
    %590 = vmatpush1.msra.mxu0 0.0
    %591 = vmatprep.subr.mxu0 0.0
    %592 = vmatpush1.msra.mxu0 0.0
    %593 = vmatprep.subr.mxu0 0.0
    %594 = vmatpush1.msra.mxu0 0.0
    %595 = vmatprep.subr.mxu0 0.0
    %596 = vmatpush1.msra.mxu0 0.0
    %597 = vmatprep.subr.mxu0 0.0
    %598 = vmatpush1.msra.mxu0 0.0
    %599 = vmatprep.subr.mxu0 0.0
    %600 = vmatpush1.msra.mxu0 0.0
    %601 = vmatprep.subr.mxu0 0.0
    %602 = vmatpush1.msra.mxu0 0.0
    %603 = vmatprep.subr.mxu0 0.0
    %604 = vmatpush1.msra.mxu0 0.0
    %605 = vmatprep.subr.mxu0 0.0
    %606 = vmatpush1.msra.mxu0 0.0
    %607 = vmatprep.subr.mxu0 0.0
    %608 = vmatpush1.msra.mxu0 0.0
    %609 = vmatprep.subr.mxu0 0.0
    %610 = vmatpush1.msra.mxu0 0.0
    %611 = vmatprep.subr.mxu0 0.0
    %612 = vmatpush1.msra.mxu0 0.0
    %613 = vmatprep.subr.mxu0 0.0
    %614 = vmatpush1.msra.mxu0 0.0
    %615 = vmatprep.subr.mxu0 0.0
    %616 = vmatpush1.msra.mxu0 0.0
    %617 = vmatprep.subr.mxu0 0.0
    %618 = vmatpush1.msra.mxu0 0.0
    %619 = vmatprep.subr.mxu0 0.0
    %620 = vmatpush1.msra.mxu0 0.0
    %621 = vmatprep.subr.mxu0 0.0
    %622 = vmatpush1.msra.mxu0 0.0
    %623 = vmatprep.subr.mxu0 0.0
    %624 = vmatpush1.msra.mxu0 0.0
    %625 = vmatprep.subr.mxu0 0.0
    %626 = vmatpush1.msra.mxu0 0.0
    %627 = vmatprep.subr.mxu0 0.0
    %628 = vmatpush1.msra.mxu0 0.0
    %629 = vmatprep.subr.mxu0 0.0
    %630 = vmatpush1.msra.mxu0 0.0
    %631 = vmatprep.subr.mxu0 0.0
    %632 = vmatpush1.msra.mxu0 0.0
    %633 = vmatprep.subr.mxu0 0.0
    %634 = vmatpush1.msra.mxu0 0.0
    %635 = vmatprep.subr.mxu0 0.0
    %636 = vmatpush1.msra.mxu0 0.0
    %637 = vmatprep.subr.mxu0 0.0
    %638 = vmatpush1.msra.mxu0 0.0
    %639 = vmatprep.mubr.f32.mxu0 0.0
    %640 = vmatmul.mubr.f32.gmra.mrb[0].mxu0 %v573
    %v641 = vpop.f32.mrb[0].mxu0
    %v642 = vadd.f32 0.0, %v641
    %v643 = vpop.f32.mrb[0].mxu0
    %644 = vdwg.mxu0
    %v645 = vadd.f32 %v142, %v642
    %v646 = vxor.u32 %v645, 2147483648
    %v647 = vmul.f32 %v646, 1.442695
    %v648 = vpow.pop %v647
    %v649 = vadd.f32 %v648, 1.0
    %v650 = vrcp.pop %v649
    %v651 = vmul.f32 1.0, %v650
    %v652 = vtanh.pop %v645
    %v653 = vmul.f32 %v651, %v452
    %655 = vrot.lane.b32.xlu0 %v652, 64
    %v656 = vpop.permute.xlu0 %655
    %v658 = vmul.f32 %v651, %v656
    %660 = vrot.lane.b32.xlu0 %v658, 32
    %v661 = vpop.permute.xlu0 %660
    %v663 = vadd.f32 %v653, %v661
    %v664 = vtanh.pop %v663
    %666 = vrot.lane.b32.xlu0 %v664, 64
    %v667 = vpop.permute.xlu0 %666
    %v669 = vmul.f32 %v651, %v667
    %v670 = vmax.f32 %v669, 0.0
    %672 = vrot.lane.b32.xlu0 %v670, 32
    %v673 = vpop.permute.xlu0 %672
    %675 = vrot.lane.b32.xlu0 %v564, 64
    %v676 = vpop.permute.xlu0 %675
    %v678 = vsel %vm65, %v673, %v676
    %v680 = vsel %vm255, %v678, 0
    %682 = vmatprep.subr.mxu0 0.0
    %683 = vmatpush1.msra.mxu0 %v45
    %684 = vmatprep.subr.mxu0 0.0
    %685 = vmatpush1.msra.mxu0 %v46
    %686 = vmatprep.subr.mxu0 0.0
    %687 = vmatpush1.msra.mxu0 %v47
    %688 = vmatprep.subr.mxu0 0.0
    %689 = vmatpush1.msra.mxu0 %v48
    %690 = vmatprep.subr.mxu0 0.0
    %691 = vmatpush1.msra.mxu0 %v49
    %692 = vmatprep.subr.mxu0 0.0
    %693 = vmatpush1.msra.mxu0 %v50
    %694 = vmatprep.subr.mxu0 0.0
    %695 = vmatpush1.msra.mxu0 %v51
    %696 = vmatprep.subr.mxu0 0.0
    %697 = vmatpush1.msra.mxu0 %v52
    %698 = vmatprep.subr.mxu0 0.0
    %699 = vmatpush1.msra.mxu0 0.0
    %700 = vmatprep.subr.mxu0 0.0
    %701 = vmatpush1.msra.mxu0 0.0
    %702 = vmatprep.subr.mxu0 0.0
    %703 = vmatpush1.msra.mxu0 0.0
    %704 = vmatprep.subr.mxu0 0.0
    %705 = vmatpush1.msra.mxu0 0.0
    %706 = vmatprep.subr.mxu0 0.0
    %707 = vmatpush1.msra.mxu0 0.0
    %708 = vmatprep.subr.mxu0 0.0
    %709 = vmatpush1.msra.mxu0 0.0
    %710 = vmatprep.subr.mxu0 0.0
    %711 = vmatpush1.msra.mxu0 0.0
    %712 = vmatprep.subr.mxu0 0.0
    %713 = vmatpush1.msra.mxu0 0.0
    %714 = vmatprep.subr.mxu0 0.0
    %715 = vmatpush1.msra.mxu0 0.0
    %716 = vmatprep.subr.mxu0 0.0
    %717 = vmatpush1.msra.mxu0 0.0
    %718 = vmatprep.subr.mxu0 0.0
    %719 = vmatpush1.msra.mxu0 0.0
    %720 = vmatprep.subr.mxu0 0.0
    %721 = vmatpush1.msra.mxu0 0.0
    %722 = vmatprep.subr.mxu0 0.0
    %723 = vmatpush1.msra.mxu0 0.0
    %724 = vmatprep.subr.mxu0 0.0
    %725 = vmatpush1.msra.mxu0 0.0
    %726 = vmatprep.subr.mxu0 0.0
    %727 = vmatpush1.msra.mxu0 0.0
    %728 = vmatprep.subr.mxu0 0.0
    %729 = vmatpush1.msra.mxu0 0.0
    %730 = vmatprep.subr.mxu0 0.0
    %731 = vmatpush1.msra.mxu0 0.0
    %732 = vmatprep.subr.mxu0 0.0
    %733 = vmatpush1.msra.mxu0 0.0
    %734 = vmatprep.subr.mxu0 0.0
    %735 = vmatpush1.msra.mxu0 0.0
    %736 = vmatprep.subr.mxu0 0.0
    %737 = vmatpush1.msra.mxu0 0.0
    %738 = vmatprep.subr.mxu0 0.0
    %739 = vmatpush1.msra.mxu0 0.0
    %740 = vmatprep.subr.mxu0 0.0
    %741 = vmatpush1.msra.mxu0 0.0
    %742 = vmatprep.subr.mxu0 0.0
    %743 = vmatpush1.msra.mxu0 0.0
    %744 = vmatprep.subr.mxu0 0.0
    %745 = vmatpush1.msra.mxu0 0.0
    %746 = vmatprep.mubr.f32.mxu0 0.0
    %747 = vmatmul.mubr.f32.gmra.mrb[0].mxu0 %v680
    %v748 = vpop.f32.mrb[0].mxu0
    %v749 = vadd.f32 %v254, %v748
    %v750 = vpop.f32.mrb[0].mxu0
    %751 = vdwg.mxu0
    %v752 = vxor.u32 %v749, 2147483648
    %v753 = vmul.f32 %v752, 1.442695
    %v754 = vpow.pop %v753
    %v755 = vadd.f32 %v754, 1.0
    %v756 = vrcp.pop %v755
    %v757 = vmul.f32 1.0, %v756
    %v758 = vtanh.pop %v749
    %v759 = vmul.f32 %v757, %v558
    %761 = vrot.lane.b32.xlu0 %v758, 64
    %v762 = vpop.permute.xlu0 %761
    %v764 = vmul.f32 %v757, %v762
    %766 = vrot.lane.b32.xlu0 %v764, 32
    %v767 = vpop.permute.xlu0 %766
    %v769 = vadd.f32 %v759, %v767
    %v770 = vtanh.pop %v769
    %772 = vrot.lane.b32.xlu0 %v770, 64
    %v773 = vpop.permute.xlu0 %772
    %v775 = vmul.f32 %v757, %v773
    %777 = vrot.lane.b32.xlu0 %v775, 32
    %v778 = vpop.permute.xlu0 %777
    %780 = vst.msk [vmem:[#allocation2 + $0x4] sm:$0x3] %vm357, %v778
    %782 = vrot.lane.b32.xlu0 %v669, 32
    %v783 = vpop.permute.xlu0 %782
    %v784 = vsel %vm65, %v783, 0
    %786 = vmatprep.subr.mxu0 0.0
    %787 = vmatpush1.msra.mxu0 %v41
    %788 = vmatprep.subr.mxu0 0.0
    %789 = vmatpush1.msra.mxu0 %v42
    %790 = vmatprep.subr.mxu0 0.0
    %791 = vmatpush1.msra.mxu0 %v43
    %792 = vmatprep.subr.mxu0 0.0
    %793 = vmatpush1.msra.mxu0 %v44
    %794 = vmatprep.subr.mxu0 0.0
    %795 = vmatpush1.msra.mxu0 0.0
    %796 = vmatprep.subr.mxu0 0.0
    %797 = vmatpush1.msra.mxu0 0.0
    %798 = vmatprep.subr.mxu0 0.0
    %799 = vmatpush1.msra.mxu0 0.0
    %800 = vmatprep.subr.mxu0 0.0
    %801 = vmatpush1.msra.mxu0 0.0
    %802 = vmatprep.subr.mxu0 0.0
    %803 = vmatpush1.msra.mxu0 0.0
    %804 = vmatprep.subr.mxu0 0.0
    %805 = vmatpush1.msra.mxu0 0.0
    %806 = vmatprep.subr.mxu0 0.0
    %807 = vmatpush1.msra.mxu0 0.0
    %808 = vmatprep.subr.mxu0 0.0
    %809 = vmatpush1.msra.mxu0 0.0
    %810 = vmatprep.subr.mxu0 0.0
    %811 = vmatpush1.msra.mxu0 0.0
    %812 = vmatprep.subr.mxu0 0.0
    %813 = vmatpush1.msra.mxu0 0.0
    %814 = vmatprep.subr.mxu0 0.0
    %815 = vmatpush1.msra.mxu0 0.0
    %816 = vmatprep.subr.mxu0 0.0
    %817 = vmatpush1.msra.mxu0 0.0
    %818 = vmatprep.subr.mxu0 0.0
    %819 = vmatpush1.msra.mxu0 0.0
    %820 = vmatprep.subr.mxu0 0.0
    %821 = vmatpush1.msra.mxu0 0.0
    %822 = vmatprep.subr.mxu0 0.0
    %823 = vmatpush1.msra.mxu0 0.0
    %824 = vmatprep.subr.mxu0 0.0
    %825 = vmatpush1.msra.mxu0 0.0
    %826 = vmatprep.subr.mxu0 0.0
    %827 = vmatpush1.msra.mxu0 0.0
    %828 = vmatprep.subr.mxu0 0.0
    %829 = vmatpush1.msra.mxu0 0.0
    %830 = vmatprep.subr.mxu0 0.0
    %831 = vmatpush1.msra.mxu0 0.0
    %832 = vmatprep.subr.mxu0 0.0
    %833 = vmatpush1.msra.mxu0 0.0
    %834 = vmatprep.subr.mxu0 0.0
    %835 = vmatpush1.msra.mxu0 0.0
    %836 = vmatprep.subr.mxu0 0.0
    %837 = vmatpush1.msra.mxu0 0.0
    %838 = vmatprep.subr.mxu0 0.0
    %839 = vmatpush1.msra.mxu0 0.0
    %840 = vmatprep.subr.mxu0 0.0
    %841 = vmatpush1.msra.mxu0 0.0
    %842 = vmatprep.subr.mxu0 0.0
    %843 = vmatpush1.msra.mxu0 0.0
    %844 = vmatprep.subr.mxu0 0.0
    %845 = vmatpush1.msra.mxu0 0.0
    %846 = vmatprep.subr.mxu0 0.0
    %847 = vmatpush1.msra.mxu0 0.0
    %848 = vmatprep.subr.mxu0 0.0
    %849 = vmatpush1.msra.mxu0 0.0
    %850 = vmatprep.mubr.f32.mxu0 0.0
    %851 = vmatmul.mubr.f32.gmra.mrb[0].mxu0 %v784
    %v852 = vpop.f32.mrb[0].mxu0
    %v853 = vadd.f32 0.0, %v852
    %v854 = vpop.f32.mrb[0].mxu0
    %855 = vdwg.mxu0
    %v856 = vadd.f32 %v146, %v853
    %v857 = vxor.u32 %v856, 2147483648
    %v858 = vmul.f32 %v857, 1.442695
    %v859 = vpow.pop %v858
    %v860 = vadd.f32 %v859, 1.0
    %v861 = vrcp.pop %v860
    %v862 = vmul.f32 1.0, %v861
    %v863 = vtanh.pop %v856
    %v864 = vmul.f32 %v862, %v663
    %866 = vrot.lane.b32.xlu0 %v863, 64
    %v867 = vpop.permute.xlu0 %866
    %v869 = vmul.f32 %v862, %v867
    %871 = vrot.lane.b32.xlu0 %v869, 32
    %v872 = vpop.permute.xlu0 %871
    %v874 = vadd.f32 %v864, %v872
    %v875 = vtanh.pop %v874
    %877 = vrot.lane.b32.xlu0 %v875, 64
    %v878 = vpop.permute.xlu0 %877
    %v880 = vmul.f32 %v862, %v878
    %v881 = vmax.f32 %v880, 0.0
    %883 = vrot.lane.b32.xlu0 %v881, 32
    %v884 = vpop.permute.xlu0 %883
    %886 = vrot.lane.b32.xlu0 %v775, 64
    %v887 = vpop.permute.xlu0 %886
    %v889 = vsel %vm65, %v884, %v887
    %v891 = vsel %vm255, %v889, 0
    %893 = vmatprep.subr.mxu0 0.0
    %894 = vmatpush1.msra.mxu0 %v45
    %895 = vmatprep.subr.mxu0 0.0
    %896 = vmatpush1.msra.mxu0 %v46
    %897 = vmatprep.subr.mxu0 0.0
    %898 = vmatpush1.msra.mxu0 %v47
    %899 = vmatprep.subr.mxu0 0.0
    %900 = vmatpush1.msra.mxu0 %v48
    %901 = vmatprep.subr.mxu0 0.0
    %902 = vmatpush1.msra.mxu0 %v49
    %903 = vmatprep.subr.mxu0 0.0
    %904 = vmatpush1.msra.mxu0 %v50
    %905 = vmatprep.subr.mxu0 0.0
    %906 = vmatpush1.msra.mxu0 %v51
    %907 = vmatprep.subr.mxu0 0.0
    %908 = vmatpush1.msra.mxu0 %v52
    %909 = vmatprep.subr.mxu0 0.0
    %910 = vmatpush1.msra.mxu0 0.0
    %911 = vmatprep.subr.mxu0 0.0
    %912 = vmatpush1.msra.mxu0 0.0
    %913 = vmatprep.subr.mxu0 0.0
    %914 = vmatpush1.msra.mxu0 0.0
    %915 = vmatprep.subr.mxu0 0.0
    %916 = vmatpush1.msra.mxu0 0.0
    %917 = vmatprep.subr.mxu0 0.0
    %918 = vmatpush1.msra.mxu0 0.0
    %919 = vmatprep.subr.mxu0 0.0
    %920 = vmatpush1.msra.mxu0 0.0
    %921 = vmatprep.subr.mxu0 0.0
    %922 = vmatpush1.msra.mxu0 0.0
    %923 = vmatprep.subr.mxu0 0.0
    %924 = vmatpush1.msra.mxu0 0.0
    %925 = vmatprep.subr.mxu0 0.0
    %926 = vmatpush1.msra.mxu0 0.0
    %927 = vmatprep.subr.mxu0 0.0
    %928 = vmatpush1.msra.mxu0 0.0
    %929 = vmatprep.subr.mxu0 0.0
    %930 = vmatpush1.msra.mxu0 0.0
    %931 = vmatprep.subr.mxu0 0.0
    %932 = vmatpush1.msra.mxu0 0.0
    %933 = vmatprep.subr.mxu0 0.0
    %934 = vmatpush1.msra.mxu0 0.0
    %935 = vmatprep.subr.mxu0 0.0
    %936 = vmatpush1.msra.mxu0 0.0
    %937 = vmatprep.subr.mxu0 0.0
    %938 = vmatpush1.msra.mxu0 0.0
    %939 = vmatprep.subr.mxu0 0.0
    %940 = vmatpush1.msra.mxu0 0.0
    %941 = vmatprep.subr.mxu0 0.0
    %942 = vmatpush1.msra.mxu0 0.0
    %943 = vmatprep.subr.mxu0 0.0
    %944 = vmatpush1.msra.mxu0 0.0
    %945 = vmatprep.subr.mxu0 0.0
    %946 = vmatpush1.msra.mxu0 0.0
    %947 = vmatprep.subr.mxu0 0.0
    %948 = vmatpush1.msra.mxu0 0.0
    %949 = vmatprep.subr.mxu0 0.0
    %950 = vmatpush1.msra.mxu0 0.0
    %951 = vmatprep.subr.mxu0 0.0
    %952 = vmatpush1.msra.mxu0 0.0
    %953 = vmatprep.subr.mxu0 0.0
    %954 = vmatpush1.msra.mxu0 0.0
    %955 = vmatprep.subr.mxu0 0.0
    %956 = vmatpush1.msra.mxu0 0.0
    %957 = vmatprep.mubr.f32.mxu0 0.0
    %958 = vmatmul.mubr.f32.gmra.mrb[0].mxu0 %v891
    %v959 = vpop.f32.mrb[0].mxu0
    %v960 = vadd.f32 %v254, %v959
    %v961 = vpop.f32.mrb[0].mxu0
    %962 = vdwg.mxu0
    %v963 = vxor.u32 %v960, 2147483648
    %v964 = vmul.f32 %v963, 1.442695
    %v965 = vpow.pop %v964
    %v966 = vadd.f32 %v965, 1.0
    %v967 = vrcp.pop %v966
    %v968 = vmul.f32 1.0, %v967
    %v969 = vtanh.pop %v960
    %v970 = vmul.f32 %v968, %v769
    %972 = vrot.lane.b32.xlu0 %v969, 64
    %v973 = vpop.permute.xlu0 %972
    %v975 = vmul.f32 %v968, %v973
    %977 = vrot.lane.b32.xlu0 %v975, 32
    %v978 = vpop.permute.xlu0 %977
    %v980 = vadd.f32 %v970, %v978
    %v981 = vtanh.pop %v980
    %983 = vrot.lane.b32.xlu0 %v981, 64
    %v984 = vpop.permute.xlu0 %983
    %v986 = vmul.f32 %v968, %v984
    %988 = vrot.lane.b32.xlu0 %v986, 32
    %v989 = vpop.permute.xlu0 %988
    %991 = vst.msk [vmem:[#allocation2 + $0x6] sm:$0x3] %vm357, %v989
    %993 = vrot.lane.b32.xlu0 %v880, 32
    %v994 = vpop.permute.xlu0 %993
    %v995 = vsel %vm65, %v994, 0
    %997 = vmatprep.subr.mxu0 0.0
    %998 = vmatpush1.msra.mxu0 %v41
    %999 = vmatprep.subr.mxu0 0.0
    %1000 = vmatpush1.msra.mxu0 %v42
    %1001 = vmatprep.subr.mxu0 0.0
    %1002 = vmatpush1.msra.mxu0 %v43
    %1003 = vmatprep.subr.mxu0 0.0
    %1004 = vmatpush1.msra.mxu0 %v44
    %1005 = vmatprep.subr.mxu0 0.0
    %1006 = vmatpush1.msra.mxu0 0.0
    %1007 = vmatprep.subr.mxu0 0.0
    %1008 = vmatpush1.msra.mxu0 0.0
    %1009 = vmatprep.subr.mxu0 0.0
    %1010 = vmatpush1.msra.mxu0 0.0
    %1011 = vmatprep.subr.mxu0 0.0
    %1012 = vmatpush1.msra.mxu0 0.0
    %1013 = vmatprep.subr.mxu0 0.0
    %1014 = vmatpush1.msra.mxu0 0.0
    %1015 = vmatprep.subr.mxu0 0.0
    %1016 = vmatpush1.msra.mxu0 0.0
    %1017 = vmatprep.subr.mxu0 0.0
    %1018 = vmatpush1.msra.mxu0 0.0
    %1019 = vmatprep.subr.mxu0 0.0
    %1020 = vmatpush1.msra.mxu0 0.0
    %1021 = vmatprep.subr.mxu0 0.0
    %1022 = vmatpush1.msra.mxu0 0.0
    %1023 = vmatprep.subr.mxu0 0.0
    %1024 = vmatpush1.msra.mxu0 0.0
    %1025 = vmatprep.subr.mxu0 0.0
    %1026 = vmatpush1.msra.mxu0 0.0
    %1027 = vmatprep.subr.mxu0 0.0
    %1028 = vmatpush1.msra.mxu0 0.0
    %1029 = vmatprep.subr.mxu0 0.0
    %1030 = vmatpush1.msra.mxu0 0.0
    %1031 = vmatprep.subr.mxu0 0.0
    %1032 = vmatpush1.msra.mxu0 0.0
    %1033 = vmatprep.subr.mxu0 0.0
    %1034 = vmatpush1.msra.mxu0 0.0
    %1035 = vmatprep.subr.mxu0 0.0
    %1036 = vmatpush1.msra.mxu0 0.0
    %1037 = vmatprep.subr.mxu0 0.0
    %1038 = vmatpush1.msra.mxu0 0.0
    %1039 = vmatprep.subr.mxu0 0.0
    %1040 = vmatpush1.msra.mxu0 0.0
    %1041 = vmatprep.subr.mxu0 0.0
    %1042 = vmatpush1.msra.mxu0 0.0
    %1043 = vmatprep.subr.mxu0 0.0
    %1044 = vmatpush1.msra.mxu0 0.0
    %1045 = vmatprep.subr.mxu0 0.0
    %1046 = vmatpush1.msra.mxu0 0.0
    %1047 = vmatprep.subr.mxu0 0.0
    %1048 = vmatpush1.msra.mxu0 0.0
    %1049 = vmatprep.subr.mxu0 0.0
    %1050 = vmatpush1.msra.mxu0 0.0
    %1051 = vmatprep.subr.mxu0 0.0
    %1052 = vmatpush1.msra.mxu0 0.0
    %1053 = vmatprep.subr.mxu0 0.0
    %1054 = vmatpush1.msra.mxu0 0.0
    %1055 = vmatprep.subr.mxu0 0.0
    %1056 = vmatpush1.msra.mxu0 0.0
    %1057 = vmatprep.subr.mxu0 0.0
    %1058 = vmatpush1.msra.mxu0 0.0
    %1059 = vmatprep.subr.mxu0 0.0
    %1060 = vmatpush1.msra.mxu0 0.0
    %1061 = vmatprep.mubr.f32.mxu0 0.0
    %1062 = vmatmul.mubr.f32.gmra.mrb[0].mxu0 %v995
    %v1063 = vpop.f32.mrb[0].mxu0
    %v1064 = vadd.f32 0.0, %v1063
    %v1065 = vpop.f32.mrb[0].mxu0
    %1066 = vdwg.mxu0
    %v1067 = vadd.f32 %v142, %v1064
    %v1068 = vxor.u32 %v1067, 2147483648
    %v1069 = vmul.f32 %v1068, 1.442695
    %v1070 = vpow.pop %v1069
    %v1071 = vadd.f32 %v1070, 1.0
    %v1072 = vrcp.pop %v1071
    %v1073 = vmul.f32 1.0, %v1072
    %v1074 = vtanh.pop %v1067
    %v1075 = vmul.f32 %v1073, %v874
    %1077 = vrot.lane.b32.xlu0 %v1074, 64
    %v1078 = vpop.permute.xlu0 %1077
    %v1080 = vmul.f32 %v1073, %v1078
    %1082 = vrot.lane.b32.xlu0 %v1080, 32
    %v1083 = vpop.permute.xlu0 %1082
    %v1085 = vadd.f32 %v1075, %v1083
    %v1086 = vtanh.pop %v1085
    %1088 = vrot.lane.b32.xlu0 %v1086, 64
    %v1089 = vpop.permute.xlu0 %1088
    %v1091 = vmul.f32 %v1073, %v1089
    %v1092 = vmax.f32 %v1091, 0.0
    %1094 = vrot.lane.b32.xlu0 %v1092, 32
    %v1095 = vpop.permute.xlu0 %1094
    %1097 = vrot.lane.b32.xlu0 %v986, 64
    %v1098 = vpop.permute.xlu0 %1097
    %v1100 = vsel %vm65, %v1095, %v1098
    %v1102 = vsel %vm255, %v1100, 0
    %1104 = vmatprep.subr.mxu0 0.0
    %1105 = vmatpush1.msra.mxu0 %v45
    %1106 = vmatprep.subr.mxu0 0.0
    %1107 = vmatpush1.msra.mxu0 %v46
    %1108 = vmatprep.subr.mxu0 0.0
    %1109 = vmatpush1.msra.mxu0 %v47
    %1110 = vmatprep.subr.mxu0 0.0
    %1111 = vmatpush1.msra.mxu0 %v48
    %1112 = vmatprep.subr.mxu0 0.0
    %1113 = vmatpush1.msra.mxu0 %v49
    %1114 = vmatprep.subr.mxu0 0.0
    %1115 = vmatpush1.msra.mxu0 %v50
    %1116 = vmatprep.subr.mxu0 0.0
    %1117 = vmatpush1.msra.mxu0 %v51
    %1118 = vmatprep.subr.mxu0 0.0
    %1119 = vmatpush1.msra.mxu0 %v52
    %1120 = vmatprep.subr.mxu0 0.0
    %1121 = vmatpush1.msra.mxu0 0.0
    %1122 = vmatprep.subr.mxu0 0.0
    %1123 = vmatpush1.msra.mxu0 0.0
    %1124 = vmatprep.subr.mxu0 0.0
    %1125 = vmatpush1.msra.mxu0 0.0
    %1126 = vmatprep.subr.mxu0 0.0
    %1127 = vmatpush1.msra.mxu0 0.0
    %1128 = vmatprep.subr.mxu0 0.0
    %1129 = vmatpush1.msra.mxu0 0.0
    %1130 = vmatprep.subr.mxu0 0.0
    %1131 = vmatpush1.msra.mxu0 0.0
    %1132 = vmatprep.subr.mxu0 0.0
    %1133 = vmatpush1.msra.mxu0 0.0
    %1134 = vmatprep.subr.mxu0 0.0
    %1135 = vmatpush1.msra.mxu0 0.0
    %1136 = vmatprep.subr.mxu0 0.0
    %1137 = vmatpush1.msra.mxu0 0.0
    %1138 = vmatprep.subr.mxu0 0.0
    %1139 = vmatpush1.msra.mxu0 0.0
    %1140 = vmatprep.subr.mxu0 0.0
    %1141 = vmatpush1.msra.mxu0 0.0
    %1142 = vmatprep.subr.mxu0 0.0
    %1143 = vmatpush1.msra.mxu0 0.0
    %1144 = vmatprep.subr.mxu0 0.0
    %1145 = vmatpush1.msra.mxu0 0.0
    %1146 = vmatprep.subr.mxu0 0.0
    %1147 = vmatpush1.msra.mxu0 0.0
    %1148 = vmatprep.subr.mxu0 0.0
    %1149 = vmatpush1.msra.mxu0 0.0
    %1150 = vmatprep.subr.mxu0 0.0
    %1151 = vmatpush1.msra.mxu0 0.0
    %1152 = vmatprep.subr.mxu0 0.0
    %1153 = vmatpush1.msra.mxu0 0.0
    %1154 = vmatprep.subr.mxu0 0.0
    %1155 = vmatpush1.msra.mxu0 0.0
    %1156 = vmatprep.subr.mxu0 0.0
    %1157 = vmatpush1.msra.mxu0 0.0
    %1158 = vmatprep.subr.mxu0 0.0
    %1159 = vmatpush1.msra.mxu0 0.0
    %1160 = vmatprep.subr.mxu0 0.0
    %1161 = vmatpush1.msra.mxu0 0.0
    %1162 = vmatprep.subr.mxu0 0.0
    %1163 = vmatpush1.msra.mxu0 0.0
    %1164 = vmatprep.subr.mxu0 0.0
    %1165 = vmatpush1.msra.mxu0 0.0
    %1166 = vmatprep.subr.mxu0 0.0
    %1167 = vmatpush1.msra.mxu0 0.0
    %1168 = vmatprep.mubr.f32.mxu0 0.0
    %1169 = vmatmul.mubr.f32.gmra.mrb[0].mxu0 %v1102
    %v1170 = vpop.f32.mrb[0].mxu0
    %v1171 = vadd.f32 %v254, %v1170
    %v1172 = vpop.f32.mrb[0].mxu0
    %1173 = vdwg.mxu0
    %v1174 = vxor.u32 %v1171, 2147483648
    %v1175 = vmul.f32 %v1174, 1.442695
    %v1176 = vpow.pop %v1175
    %v1177 = vadd.f32 %v1176, 1.0
    %v1178 = vrcp.pop %v1177
    %v1179 = vmul.f32 1.0, %v1178
    %v1180 = vtanh.pop %v1171
    %v1181 = vmul.f32 %v1179, %v980
    %1183 = vrot.lane.b32.xlu0 %v1180, 64
    %v1184 = vpop.permute.xlu0 %1183
    %v1186 = vmul.f32 %v1179, %v1184
    %1188 = vrot.lane.b32.xlu0 %v1186, 32
    %v1189 = vpop.permute.xlu0 %1188
    %v1191 = vadd.f32 %v1181, %v1189
    %v1192 = vtanh.pop %v1191
    %1194 = vrot.lane.b32.xlu0 %v1192, 64
    %v1195 = vpop.permute.xlu0 %1194
    %v1197 = vmul.f32 %v1179, %v1195
    %1199 = vrot.lane.b32.xlu0 %v1197, 32
    %v1200 = vpop.permute.xlu0 %1199
    %1202 = vst.msk [vmem:[#allocation2 + $0x8] sm:$0x3] %vm357, %v1200
    %1204 = vrot.lane.b32.xlu0 %v1091, 32
    %v1205 = vpop.permute.xlu0 %1204
    %v1206 = vsel %vm65, %v1205, 0
    %1208 = vmatprep.subr.mxu0 0.0
    %1209 = vmatpush1.msra.mxu0 %v41
    %1210 = vmatprep.subr.mxu0 0.0
    %1211 = vmatpush1.msra.mxu0 %v42
    %1212 = vmatprep.subr.mxu0 0.0
    %1213 = vmatpush1.msra.mxu0 %v43
    %1214 = vmatprep.subr.mxu0 0.0
    %1215 = vmatpush1.msra.mxu0 %v44
    %1216 = vmatprep.subr.mxu0 0.0
    %1217 = vmatpush1.msra.mxu0 0.0
    %1218 = vmatprep.subr.mxu0 0.0
    %1219 = vmatpush1.msra.mxu0 0.0
    %1220 = vmatprep.subr.mxu0 0.0
    %1221 = vmatpush1.msra.mxu0 0.0
    %1222 = vmatprep.subr.mxu0 0.0
    %1223 = vmatpush1.msra.mxu0 0.0
    %1224 = vmatprep.subr.mxu0 0.0
    %1225 = vmatpush1.msra.mxu0 0.0
    %1226 = vmatprep.subr.mxu0 0.0
    %1227 = vmatpush1.msra.mxu0 0.0
    %1228 = vmatprep.subr.mxu0 0.0
    %1229 = vmatpush1.msra.mxu0 0.0
    %1230 = vmatprep.subr.mxu0 0.0
    %1231 = vmatpush1.msra.mxu0 0.0
    %1232 = vmatprep.subr.mxu0 0.0
    %1233 = vmatpush1.msra.mxu0 0.0
    %1234 = vmatprep.subr.mxu0 0.0
    %1235 = vmatpush1.msra.mxu0 0.0
    %1236 = vmatprep.subr.mxu0 0.0
    %1237 = vmatpush1.msra.mxu0 0.0
    %1238 = vmatprep.subr.mxu0 0.0
    %1239 = vmatpush1.msra.mxu0 0.0
    %1240 = vmatprep.subr.mxu0 0.0
    %1241 = vmatpush1.msra.mxu0 0.0
    %1242 = vmatprep.subr.mxu0 0.0
    %1243 = vmatpush1.msra.mxu0 0.0
    %1244 = vmatprep.subr.mxu0 0.0
    %1245 = vmatpush1.msra.mxu0 0.0
    %1246 = vmatprep.subr.mxu0 0.0
    %1247 = vmatpush1.msra.mxu0 0.0
    %1248 = vmatprep.subr.mxu0 0.0
    %1249 = vmatpush1.msra.mxu0 0.0
    %1250 = vmatprep.subr.mxu0 0.0
    %1251 = vmatpush1.msra.mxu0 0.0
    %1252 = vmatprep.subr.mxu0 0.0
    %1253 = vmatpush1.msra.mxu0 0.0
    %1254 = vmatprep.subr.mxu0 0.0
    %1255 = vmatpush1.msra.mxu0 0.0
    %1256 = vmatprep.subr.mxu0 0.0
    %1257 = vmatpush1.msra.mxu0 0.0
    %1258 = vmatprep.subr.mxu0 0.0
    %1259 = vmatpush1.msra.mxu0 0.0
    %1260 = vmatprep.subr.mxu0 0.0
    %1261 = vmatpush1.msra.mxu0 0.0
    %1262 = vmatprep.subr.mxu0 0.0
    %1263 = vmatpush1.msra.mxu0 0.0
    %1264 = vmatprep.subr.mxu0 0.0
    %1265 = vmatpush1.msra.mxu0 0.0
    %1266 = vmatprep.subr.mxu0 0.0
    %1267 = vmatpush1.msra.mxu0 0.0
    %1268 = vmatprep.subr.mxu0 0.0
    %1269 = vmatpush1.msra.mxu0 0.0
    %1270 = vmatprep.subr.mxu0 0.0
    %1271 = vmatpush1.msra.mxu0 0.0
    %1272 = vmatprep.mubr.f32.mxu0 0.0
    %1273 = vmatmul.mubr.f32.gmra.mrb[0].mxu0 %v1206
    %v1274 = vpop.f32.mrb[0].mxu0
    %v1275 = vadd.f32 0.0, %v1274
    %v1276 = vpop.f32.mrb[0].mxu0
    %1277 = vdwg.mxu0
    %v1278 = vadd.f32 %v146, %v1275
    %v1279 = vxor.u32 %v1278, 2147483648
    %v1280 = vmul.f32 %v1279, 1.442695
    %v1281 = vpow.pop %v1280
    %v1282 = vadd.f32 %v1281, 1.0
    %v1283 = vrcp.pop %v1282
    %v1284 = vmul.f32 1.0, %v1283
    %v1285 = vtanh.pop %v1278
    %v1286 = vmul.f32 %v1284, %v1085
    %1288 = vrot.lane.b32.xlu0 %v1285, 64
    %v1289 = vpop.permute.xlu0 %1288
    %v1291 = vmul.f32 %v1284, %v1289
    %1293 = vrot.lane.b32.xlu0 %v1291, 32
    %v1294 = vpop.permute.xlu0 %1293
    %v1296 = vadd.f32 %v1286, %v1294
    %v1297 = vtanh.pop %v1296
    %1299 = vrot.lane.b32.xlu0 %v1297, 64
    %v1300 = vpop.permute.xlu0 %1299
    %v1302 = vmul.f32 %v1284, %v1300
    %v1303 = vmax.f32 %v1302, 0.0
    %1305 = vrot.lane.b32.xlu0 %v1303, 32
    %v1306 = vpop.permute.xlu0 %1305
    %1308 = vrot.lane.b32.xlu0 %v1197, 64
    %v1309 = vpop.permute.xlu0 %1308
    %v1311 = vsel %vm65, %v1306, %v1309
    %v1313 = vsel %vm255, %v1311, 0
    %1315 = vmatprep.subr.mxu0 0.0
    %1316 = vmatpush1.msra.mxu0 %v45
    %1317 = vmatprep.subr.mxu0 0.0
    %1318 = vmatpush1.msra.mxu0 %v46
    %1319 = vmatprep.subr.mxu0 0.0
    %1320 = vmatpush1.msra.mxu0 %v47
    %1321 = vmatprep.subr.mxu0 0.0
    %1322 = vmatpush1.msra.mxu0 %v48
    %1323 = vmatprep.subr.mxu0 0.0
    %1324 = vmatpush1.msra.mxu0 %v49
    %1325 = vmatprep.subr.mxu0 0.0
    %1326 = vmatpush1.msra.mxu0 %v50
    %1327 = vmatprep.subr.mxu0 0.0
    %1328 = vmatpush1.msra.mxu0 %v51
    %1329 = vmatprep.subr.mxu0 0.0
    %1330 = vmatpush1.msra.mxu0 %v52
    %1331 = vmatprep.subr.mxu0 0.0
    %1332 = vmatpush1.msra.mxu0 0.0
    %1333 = vmatprep.subr.mxu0 0.0
    %1334 = vmatpush1.msra.mxu0 0.0
    %1335 = vmatprep.subr.mxu0 0.0
    %1336 = vmatpush1.msra.mxu0 0.0
    %1337 = vmatprep.subr.mxu0 0.0
    %1338 = vmatpush1.msra.mxu0 0.0
    %1339 = vmatprep.subr.mxu0 0.0
    %1340 = vmatpush1.msra.mxu0 0.0
    %1341 = vmatprep.subr.mxu0 0.0
    %1342 = vmatpush1.msra.mxu0 0.0
    %1343 = vmatprep.subr.mxu0 0.0
    %1344 = vmatpush1.msra.mxu0 0.0
    %1345 = vmatprep.subr.mxu0 0.0
    %1346 = vmatpush1.msra.mxu0 0.0
    %1347 = vmatprep.subr.mxu0 0.0
    %1348 = vmatpush1.msra.mxu0 0.0
    %1349 = vmatprep.subr.mxu0 0.0
    %1350 = vmatpush1.msra.mxu0 0.0
    %1351 = vmatprep.subr.mxu0 0.0
    %1352 = vmatpush1.msra.mxu0 0.0
    %1353 = vmatprep.subr.mxu0 0.0
    %1354 = vmatpush1.msra.mxu0 0.0
    %1355 = vmatprep.subr.mxu0 0.0
    %1356 = vmatpush1.msra.mxu0 0.0
    %1357 = vmatprep.subr.mxu0 0.0
    %1358 = vmatpush1.msra.mxu0 0.0
    %1359 = vmatprep.subr.mxu0 0.0
    %1360 = vmatpush1.msra.mxu0 0.0
    %1361 = vmatprep.subr.mxu0 0.0
    %1362 = vmatpush1.msra.mxu0 0.0
    %1363 = vmatprep.subr.mxu0 0.0
    %1364 = vmatpush1.msra.mxu0 0.0
    %1365 = vmatprep.subr.mxu0 0.0
    %1366 = vmatpush1.msra.mxu0 0.0
    %1367 = vmatprep.subr.mxu0 0.0
    %1368 = vmatpush1.msra.mxu0 0.0
    %1369 = vmatprep.subr.mxu0 0.0
    %1370 = vmatpush1.msra.mxu0 0.0
    %1371 = vmatprep.subr.mxu0 0.0
    %1372 = vmatpush1.msra.mxu0 0.0
    %1373 = vmatprep.subr.mxu0 0.0
    %1374 = vmatpush1.msra.mxu0 0.0
    %1375 = vmatprep.subr.mxu0 0.0
    %1376 = vmatpush1.msra.mxu0 0.0
    %1377 = vmatprep.subr.mxu0 0.0
    %1378 = vmatpush1.msra.mxu0 0.0
    %1379 = vmatprep.mubr.f32.mxu0 0.0
    %1380 = vmatmul.mubr.f32.gmra.mrb[0].mxu0 %v1313
    %v1381 = vpop.f32.mrb[0].mxu0
    %v1382 = vadd.f32 %v254, %v1381
    %v1383 = vpop.f32.mrb[0].mxu0
    %1384 = vdwg.mxu0
    %v1385 = vxor.u32 %v1382, 2147483648
    %v1386 = vmul.f32 %v1385, 1.442695
    %v1387 = vpow.pop %v1386
    %v1388 = vadd.f32 %v1387, 1.0
    %v1389 = vrcp.pop %v1388
    %v1390 = vmul.f32 1.0, %v1389
    %v1391 = vtanh.pop %v1382
    %v1392 = vmul.f32 %v1390, %v1191
    %1394 = vrot.lane.b32.xlu0 %v1391, 64
    %v1395 = vpop.permute.xlu0 %1394
    %v1397 = vmul.f32 %v1390, %v1395
    %1399 = vrot.lane.b32.xlu0 %v1397, 32
    %v1400 = vpop.permute.xlu0 %1399
    %v1402 = vadd.f32 %v1392, %v1400
    %v1403 = vtanh.pop %v1402
    %1405 = vrot.lane.b32.xlu0 %v1403, 64
    %v1406 = vpop.permute.xlu0 %1405
    %v1408 = vmul.f32 %v1390, %v1406
    %1410 = vrot.lane.b32.xlu0 %v1408, 32
    %v1411 = vpop.permute.xlu0 %1410
    %1413 = vst.msk [vmem:[#allocation2 + $0xa] sm:$0x3] %vm357, %v1411
    %1415 = vrot.lane.b32.xlu0 %v1302, 32
    %v1416 = vpop.permute.xlu0 %1415
    %v1417 = vsel %vm65, %v1416, 0
    %1419 = vmatprep.subr.mxu0 0.0
    %1420 = vmatpush1.msra.mxu0 %v41
    %1421 = vmatprep.subr.mxu0 0.0
    %1422 = vmatpush1.msra.mxu0 %v42
    %1423 = vmatprep.subr.mxu0 0.0
    %1424 = vmatpush1.msra.mxu0 %v43
    %1425 = vmatprep.subr.mxu0 0.0
    %1426 = vmatpush1.msra.mxu0 %v44
    %1427 = vmatprep.subr.mxu0 0.0
    %1428 = vmatpush1.msra.mxu0 0.0
    %1429 = vmatprep.subr.mxu0 0.0
    %1430 = vmatpush1.msra.mxu0 0.0
    %1431 = vmatprep.subr.mxu0 0.0
    %1432 = vmatpush1.msra.mxu0 0.0
    %1433 = vmatprep.subr.mxu0 0.0
    %1434 = vmatpush1.msra.mxu0 0.0
    %1435 = vmatprep.subr.mxu0 0.0
    %1436 = vmatpush1.msra.mxu0 0.0
    %1437 = vmatprep.subr.mxu0 0.0
    %1438 = vmatpush1.msra.mxu0 0.0
    %1439 = vmatprep.subr.mxu0 0.0
    %1440 = vmatpush1.msra.mxu0 0.0
    %1441 = vmatprep.subr.mxu0 0.0
    %1442 = vmatpush1.msra.mxu0 0.0
    %1443 = vmatprep.subr.mxu0 0.0
    %1444 = vmatpush1.msra.mxu0 0.0
    %1445 = vmatprep.subr.mxu0 0.0
    %1446 = vmatpush1.msra.mxu0 0.0
    %1447 = vmatprep.subr.mxu0 0.0
    %1448 = vmatpush1.msra.mxu0 0.0
    %1449 = vmatprep.subr.mxu0 0.0
    %1450 = vmatpush1.msra.mxu0 0.0
    %1451 = vmatprep.subr.mxu0 0.0
    %1452 = vmatpush1.msra.mxu0 0.0
    %1453 = vmatprep.subr.mxu0 0.0
    %1454 = vmatpush1.msra.mxu0 0.0
    %1455 = vmatprep.subr.mxu0 0.0
    %1456 = vmatpush1.msra.mxu0 0.0
    %1457 = vmatprep.subr.mxu0 0.0
    %1458 = vmatpush1.msra.mxu0 0.0
    %1459 = vmatprep.subr.mxu0 0.0
    %1460 = vmatpush1.msra.mxu0 0.0
    %1461 = vmatprep.subr.mxu0 0.0
    %1462 = vmatpush1.msra.mxu0 0.0
    %1463 = vmatprep.subr.mxu0 0.0
    %1464 = vmatpush1.msra.mxu0 0.0
    %1465 = vmatprep.subr.mxu0 0.0
    %1466 = vmatpush1.msra.mxu0 0.0
    %1467 = vmatprep.subr.mxu0 0.0
    %1468 = vmatpush1.msra.mxu0 0.0
    %1469 = vmatprep.subr.mxu0 0.0
    %1470 = vmatpush1.msra.mxu0 0.0
    %1471 = vmatprep.subr.mxu0 0.0
    %1472 = vmatpush1.msra.mxu0 0.0
    %1473 = vmatprep.subr.mxu0 0.0
    %1474 = vmatpush1.msra.mxu0 0.0
    %1475 = vmatprep.subr.mxu0 0.0
    %1476 = vmatpush1.msra.mxu0 0.0
    %1477 = vmatprep.subr.mxu0 0.0
    %1478 = vmatpush1.msra.mxu0 0.0
    %1479 = vmatprep.subr.mxu0 0.0
    %1480 = vmatpush1.msra.mxu0 0.0
    %1481 = vmatprep.subr.mxu0 0.0
    %1482 = vmatpush1.msra.mxu0 0.0
    %1483 = vmatprep.mubr.f32.mxu0 0.0
    %1484 = vmatmul.mubr.f32.gmra.mrb[0].mxu0 %v1417
    %v1485 = vpop.f32.mrb[0].mxu0
    %v1486 = vadd.f32 0.0, %v1485
    %v1487 = vpop.f32.mrb[0].mxu0
    %1488 = vdwg.mxu0
    %v1489 = vadd.f32 %v142, %v1486
    %v1490 = vxor.u32 %v1489, 2147483648
    %v1491 = vmul.f32 %v1490, 1.442695
    %v1492 = vpow.pop %v1491
    %v1493 = vadd.f32 %v1492, 1.0
    %v1494 = vrcp.pop %v1493
    %v1495 = vmul.f32 1.0, %v1494
    %v1496 = vtanh.pop %v1489
    %v1497 = vmul.f32 %v1495, %v1296
    %1499 = vrot.lane.b32.xlu0 %v1496, 64
    %v1500 = vpop.permute.xlu0 %1499
    %v1502 = vmul.f32 %v1495, %v1500
    %1504 = vrot.lane.b32.xlu0 %v1502, 32
    %v1505 = vpop.permute.xlu0 %1504
    %v1507 = vadd.f32 %v1497, %v1505
    %v1508 = vtanh.pop %v1507
    %1510 = vrot.lane.b32.xlu0 %v1508, 64
    %v1511 = vpop.permute.xlu0 %1510
    %v1513 = vmul.f32 %v1495, %v1511
    %v1514 = vmax.f32 %v1513, 0.0
    %1516 = vrot.lane.b32.xlu0 %v1514, 32
    %v1517 = vpop.permute.xlu0 %1516
    %1519 = vrot.lane.b32.xlu0 %v1408, 64
    %v1520 = vpop.permute.xlu0 %1519
    %v1522 = vsel %vm65, %v1517, %v1520
    %v1524 = vsel %vm255, %v1522, 0
    %1526 = vmatprep.subr.mxu0 0.0
    %1527 = vmatpush1.msra.mxu0 %v45
    %1528 = vmatprep.subr.mxu0 0.0
    %1529 = vmatpush1.msra.mxu0 %v46
    %1530 = vmatprep.subr.mxu0 0.0
    %1531 = vmatpush1.msra.mxu0 %v47
    %1532 = vmatprep.subr.mxu0 0.0
    %1533 = vmatpush1.msra.mxu0 %v48
    %1534 = vmatprep.subr.mxu0 0.0
    %1535 = vmatpush1.msra.mxu0 %v49
    %1536 = vmatprep.subr.mxu0 0.0
    %1537 = vmatpush1.msra.mxu0 %v50
    %1538 = vmatprep.subr.mxu0 0.0
    %1539 = vmatpush1.msra.mxu0 %v51
    %1540 = vmatprep.subr.mxu0 0.0
    %1541 = vmatpush1.msra.mxu0 %v52
    %1542 = vmatprep.subr.mxu0 0.0
    %1543 = vmatpush1.msra.mxu0 0.0
    %1544 = vmatprep.subr.mxu0 0.0
    %1545 = vmatpush1.msra.mxu0 0.0
    %1546 = vmatprep.subr.mxu0 0.0
    %1547 = vmatpush1.msra.mxu0 0.0
    %1548 = vmatprep.subr.mxu0 0.0
    %1549 = vmatpush1.msra.mxu0 0.0
    %1550 = vmatprep.subr.mxu0 0.0
    %1551 = vmatpush1.msra.mxu0 0.0
    %1552 = vmatprep.subr.mxu0 0.0
    %1553 = vmatpush1.msra.mxu0 0.0
    %1554 = vmatprep.subr.mxu0 0.0
    %1555 = vmatpush1.msra.mxu0 0.0
    %1556 = vmatprep.subr.mxu0 0.0
    %1557 = vmatpush1.msra.mxu0 0.0
    %1558 = vmatprep.subr.mxu0 0.0
    %1559 = vmatpush1.msra.mxu0 0.0
    %1560 = vmatprep.subr.mxu0 0.0
    %1561 = vmatpush1.msra.mxu0 0.0
    %1562 = vmatprep.subr.mxu0 0.0
    %1563 = vmatpush1.msra.mxu0 0.0
    %1564 = vmatprep.subr.mxu0 0.0
    %1565 = vmatpush1.msra.mxu0 0.0
    %1566 = vmatprep.subr.mxu0 0.0
    %1567 = vmatpush1.msra.mxu0 0.0
    %1568 = vmatprep.subr.mxu0 0.0
    %1569 = vmatpush1.msra.mxu0 0.0
    %1570 = vmatprep.subr.mxu0 0.0
    %1571 = vmatpush1.msra.mxu0 0.0
    %1572 = vmatprep.subr.mxu0 0.0
    %1573 = vmatpush1.msra.mxu0 0.0
    %1574 = vmatprep.subr.mxu0 0.0
    %1575 = vmatpush1.msra.mxu0 0.0
    %1576 = vmatprep.subr.mxu0 0.0
    %1577 = vmatpush1.msra.mxu0 0.0
    %1578 = vmatprep.subr.mxu0 0.0
    %1579 = vmatpush1.msra.mxu0 0.0
    %1580 = vmatprep.subr.mxu0 0.0
    %1581 = vmatpush1.msra.mxu0 0.0
    %1582 = vmatprep.subr.mxu0 0.0
    %1583 = vmatpush1.msra.mxu0 0.0
    %1584 = vmatprep.subr.mxu0 0.0
    %1585 = vmatpush1.msra.mxu0 0.0
    %1586 = vmatprep.subr.mxu0 0.0
    %1587 = vmatpush1.msra.mxu0 0.0
    %1588 = vmatprep.subr.mxu0 0.0
    %1589 = vmatpush1.msra.mxu0 0.0
    %1590 = vmatprep.mubr.f32.mxu0 0.0
    %1591 = vmatmul.mubr.f32.gmra.mrb[0].mxu0 %v1524
    %v1592 = vpop.f32.mrb[0].mxu0
    %v1593 = vadd.f32 %v254, %v1592
    %v1594 = vpop.f32.mrb[0].mxu0
    %1595 = vdwg.mxu0
    %v1596 = vxor.u32 %v1593, 2147483648
    %v1597 = vmul.f32 %v1596, 1.442695
    %v1598 = vpow.pop %v1597
    %v1599 = vadd.f32 %v1598, 1.0
    %v1600 = vrcp.pop %v1599
    %v1601 = vmul.f32 1.0, %v1600
    %v1602 = vtanh.pop %v1593
    %v1603 = vmul.f32 %v1601, %v1402
    %1605 = vrot.lane.b32.xlu0 %v1602, 64
    %v1606 = vpop.permute.xlu0 %1605
    %v1608 = vmul.f32 %v1601, %v1606
    %1610 = vrot.lane.b32.xlu0 %v1608, 32
    %v1611 = vpop.permute.xlu0 %1610
    %v1613 = vadd.f32 %v1603, %v1611
    %v1614 = vtanh.pop %v1613
    %1616 = vrot.lane.b32.xlu0 %v1614, 64
    %v1617 = vpop.permute.xlu0 %1616
    %v1619 = vmul.f32 %v1601, %v1617
    %1621 = vrot.lane.b32.xlu0 %v1619, 32
    %v1622 = vpop.permute.xlu0 %1621
    %1624 = vst.msk [vmem:[#allocation2 + $0xc] sm:$0x3] %vm357, %v1622
    %1626 = vrot.lane.b32.xlu0 %v1513, 32
    %v1627 = vpop.permute.xlu0 %1626
    %v1628 = vsel %vm65, %v1627, 0
    %1630 = vmatprep.subr.mxu0 0.0
    %1631 = vmatpush1.msra.mxu0 %v41
    %1632 = vmatprep.subr.mxu0 0.0
    %1633 = vmatpush1.msra.mxu0 %v42
    %1634 = vmatprep.subr.mxu0 0.0
    %1635 = vmatpush1.msra.mxu0 %v43
    %1636 = vmatprep.subr.mxu0 0.0
    %1637 = vmatpush1.msra.mxu0 %v44
    %1638 = vmatprep.subr.mxu0 0.0
    %1639 = vmatpush1.msra.mxu0 0.0
    %1640 = vmatprep.subr.mxu0 0.0
    %1641 = vmatpush1.msra.mxu0 0.0
    %1642 = vmatprep.subr.mxu0 0.0
    %1643 = vmatpush1.msra.mxu0 0.0
    %1644 = vmatprep.subr.mxu0 0.0
    %1645 = vmatpush1.msra.mxu0 0.0
    %1646 = vmatprep.subr.mxu0 0.0
    %1647 = vmatpush1.msra.mxu0 0.0
    %1648 = vmatprep.subr.mxu0 0.0
    %1649 = vmatpush1.msra.mxu0 0.0
    %1650 = vmatprep.subr.mxu0 0.0
    %1651 = vmatpush1.msra.mxu0 0.0
    %1652 = vmatprep.subr.mxu0 0.0
    %1653 = vmatpush1.msra.mxu0 0.0
    %1654 = vmatprep.subr.mxu0 0.0
    %1655 = vmatpush1.msra.mxu0 0.0
    %1656 = vmatprep.subr.mxu0 0.0
    %1657 = vmatpush1.msra.mxu0 0.0
    %1658 = vmatprep.subr.mxu0 0.0
    %1659 = vmatpush1.msra.mxu0 0.0
    %1660 = vmatprep.subr.mxu0 0.0
    %1661 = vmatpush1.msra.mxu0 0.0
    %1662 = vmatprep.subr.mxu0 0.0
    %1663 = vmatpush1.msra.mxu0 0.0
    %1664 = vmatprep.subr.mxu0 0.0
    %1665 = vmatpush1.msra.mxu0 0.0
    %1666 = vmatprep.subr.mxu0 0.0
    %1667 = vmatpush1.msra.mxu0 0.0
    %1668 = vmatprep.subr.mxu0 0.0
    %1669 = vmatpush1.msra.mxu0 0.0
    %1670 = vmatprep.subr.mxu0 0.0
    %1671 = vmatpush1.msra.mxu0 0.0
    %1672 = vmatprep.subr.mxu0 0.0
    %1673 = vmatpush1.msra.mxu0 0.0
    %1674 = vmatprep.subr.mxu0 0.0
    %1675 = vmatpush1.msra.mxu0 0.0
    %1676 = vmatprep.subr.mxu0 0.0
    %1677 = vmatpush1.msra.mxu0 0.0
    %1678 = vmatprep.subr.mxu0 0.0
    %1679 = vmatpush1.msra.mxu0 0.0
    %1680 = vmatprep.subr.mxu0 0.0
    %1681 = vmatpush1.msra.mxu0 0.0
    %1682 = vmatprep.subr.mxu0 0.0
    %1683 = vmatpush1.msra.mxu0 0.0
    %1684 = vmatprep.subr.mxu0 0.0
    %1685 = vmatpush1.msra.mxu0 0.0
    %1686 = vmatprep.subr.mxu0 0.0
    %1687 = vmatpush1.msra.mxu0 0.0
    %1688 = vmatprep.subr.mxu0 0.0
    %1689 = vmatpush1.msra.mxu0 0.0
    %1690 = vmatprep.subr.mxu0 0.0
    %1691 = vmatpush1.msra.mxu0 0.0
    %1692 = vmatprep.subr.mxu0 0.0
    %1693 = vmatpush1.msra.mxu0 0.0
    %1694 = vmatprep.mubr.f32.mxu0 0.0
    %1695 = vmatmul.mubr.f32.gmra.mrb[0].mxu0 %v1628
    %v1696 = vpop.f32.mrb[0].mxu0
    %v1697 = vadd.f32 0.0, %v1696
    %v1698 = vpop.f32.mrb[0].mxu0
    %1699 = vdwg.mxu0
    %v1700 = vadd.f32 %v146, %v1697
    %v1701 = vxor.u32 %v1700, 2147483648
    %v1702 = vmul.f32 %v1701, 1.442695
    %v1703 = vpow.pop %v1702
    %v1704 = vadd.f32 %v1703, 1.0
    %v1705 = vrcp.pop %v1704
    %v1706 = vmul.f32 1.0, %v1705
    %v1707 = vtanh.pop %v1700
    %v1708 = vmul.f32 %v1706, %v1507
    %1710 = vrot.lane.b32.xlu0 %v1707, 64
    %v1711 = vpop.permute.xlu0 %1710
    %v1713 = vmul.f32 %v1706, %v1711
    %1715 = vrot.lane.b32.xlu0 %v1713, 32
    %v1716 = vpop.permute.xlu0 %1715
    %v1718 = vadd.f32 %v1708, %v1716
    %v1719 = vtanh.pop %v1718
    %1721 = vrot.lane.b32.xlu0 %v1719, 64
    %v1722 = vpop.permute.xlu0 %1721
    %v1724 = vmul.f32 %v1706, %v1722
    %v1725 = vmax.f32 %v1724, 0.0
    %1727 = vrot.lane.b32.xlu0 %v1725, 32
    %v1728 = vpop.permute.xlu0 %1727
    %1730 = vrot.lane.b32.xlu0 %v1619, 64
    %v1731 = vpop.permute.xlu0 %1730
    %v1733 = vsel %vm65, %v1728, %v1731
    %v1735 = vsel %vm255, %v1733, 0
    %1737 = vmatprep.subr.mxu0 0.0
    %1738 = vmatpush1.msra.mxu0 %v45
    %1739 = vmatprep.subr.mxu0 0.0
    %1740 = vmatpush1.msra.mxu0 %v46
    %1741 = vmatprep.subr.mxu0 0.0
    %1742 = vmatpush1.msra.mxu0 %v47
    %1743 = vmatprep.subr.mxu0 0.0
    %1744 = vmatpush1.msra.mxu0 %v48
    %1745 = vmatprep.subr.mxu0 0.0
    %1746 = vmatpush1.msra.mxu0 %v49
    %1747 = vmatprep.subr.mxu0 0.0
    %1748 = vmatpush1.msra.mxu0 %v50
    %1749 = vmatprep.subr.mxu0 0.0
    %1750 = vmatpush1.msra.mxu0 %v51
    %1751 = vmatprep.subr.mxu0 0.0
    %1752 = vmatpush1.msra.mxu0 %v52
    %1753 = vmatprep.subr.mxu0 0.0
    %1754 = vmatpush1.msra.mxu0 0.0
    %1755 = vmatprep.subr.mxu0 0.0
    %1756 = vmatpush1.msra.mxu0 0.0
    %1757 = vmatprep.subr.mxu0 0.0
    %1758 = vmatpush1.msra.mxu0 0.0
    %1759 = vmatprep.subr.mxu0 0.0
    %1760 = vmatpush1.msra.mxu0 0.0
    %1761 = vmatprep.subr.mxu0 0.0
    %1762 = vmatpush1.msra.mxu0 0.0
    %1763 = vmatprep.subr.mxu0 0.0
    %1764 = vmatpush1.msra.mxu0 0.0
    %1765 = vmatprep.subr.mxu0 0.0
    %1766 = vmatpush1.msra.mxu0 0.0
    %1767 = vmatprep.subr.mxu0 0.0
    %1768 = vmatpush1.msra.mxu0 0.0
    %1769 = vmatprep.subr.mxu0 0.0
    %1770 = vmatpush1.msra.mxu0 0.0
    %1771 = vmatprep.subr.mxu0 0.0
    %1772 = vmatpush1.msra.mxu0 0.0
    %1773 = vmatprep.subr.mxu0 0.0
    %1774 = vmatpush1.msra.mxu0 0.0
    %1775 = vmatprep.subr.mxu0 0.0
    %1776 = vmatpush1.msra.mxu0 0.0
    %1777 = vmatprep.subr.mxu0 0.0
    %1778 = vmatpush1.msra.mxu0 0.0
    %1779 = vmatprep.subr.mxu0 0.0
    %1780 = vmatpush1.msra.mxu0 0.0
    %1781 = vmatprep.subr.mxu0 0.0
    %1782 = vmatpush1.msra.mxu0 0.0
    %1783 = vmatprep.subr.mxu0 0.0
    %1784 = vmatpush1.msra.mxu0 0.0
    %1785 = vmatprep.subr.mxu0 0.0
    %1786 = vmatpush1.msra.mxu0 0.0
    %1787 = vmatprep.subr.mxu0 0.0
    %1788 = vmatpush1.msra.mxu0 0.0
    %1789 = vmatprep.subr.mxu0 0.0
    %1790 = vmatpush1.msra.mxu0 0.0
    %1791 = vmatprep.subr.mxu0 0.0
    %1792 = vmatpush1.msra.mxu0 0.0
    %1793 = vmatprep.subr.mxu0 0.0
    %1794 = vmatpush1.msra.mxu0 0.0
    %1795 = vmatprep.subr.mxu0 0.0
    %1796 = vmatpush1.msra.mxu0 0.0
    %1797 = vmatprep.subr.mxu0 0.0
    %1798 = vmatpush1.msra.mxu0 0.0
    %1799 = vmatprep.subr.mxu0 0.0
    %1800 = vmatpush1.msra.mxu0 0.0
    %1801 = vmatprep.mubr.f32.mxu0 0.0
    %1802 = vmatmul.mubr.f32.gmra.mrb[0].mxu0 %v1735
    %v1803 = vpop.f32.mrb[0].mxu0
    %v1804 = vadd.f32 %v254, %v1803
    %v1805 = vpop.f32.mrb[0].mxu0
    %1806 = vdwg.mxu0
    %v1807 = vxor.u32 %v1804, 2147483648
    %v1808 = vmul.f32 %v1807, 1.442695
    %v1809 = vpow.pop %v1808
    %v1810 = vadd.f32 %v1809, 1.0
    %v1811 = vrcp.pop %v1810
    %v1812 = vmul.f32 1.0, %v1811
    %v1813 = vtanh.pop %v1804
    %v1814 = vmul.f32 %v1812, %v1613
    %1816 = vrot.lane.b32.xlu0 %v1813, 64
    %v1817 = vpop.permute.xlu0 %1816
    %v1819 = vmul.f32 %v1812, %v1817
    %1821 = vrot.lane.b32.xlu0 %v1819, 32
    %v1822 = vpop.permute.xlu0 %1821
    %v1824 = vadd.f32 %v1814, %v1822
    %v1825 = vtanh.pop %v1824
    %1827 = vrot.lane.b32.xlu0 %v1825, 64
    %v1828 = vpop.permute.xlu0 %1827
    %v1830 = vmul.f32 %v1812, %v1828
    %1832 = vrot.lane.b32.xlu0 %v1830, 32
    %v1833 = vpop.permute.xlu0 %1832
    %1835 = vst.msk [vmem:[#allocation2 + $0xe] sm:$0x3] %vm357, %v1833
    %v1836 = vld [vmem:[#allocation2] sm:$0xff]
    %v1837 = vld [vmem:[#allocation2 + $0x8] sm:$0xff]
    %v1838 = vlaneseq
    %v1839 = vshrl.u32 %v1838, 7
    %v1840 = vsub.s32 0, %v1839
    %v1841 = vrot.slane %v59, %v1840
    %v1843 = vsel %vm65, %v1836, 0
    %v1846 = vsel %vm65, %v1837, 0
    %1848 = vmatprep.subr.mxu0 0.0
    %1849 = vmatpush1.msra.mxu0 %v53
    %1850 = vmatprep.subr.mxu0 0.0
    %1851 = vmatpush1.msra.mxu0 %v54
    %1852 = vmatprep.subr.mxu0 0.0
    %1853 = vmatpush1.msra.mxu0 %v55
    %1854 = vmatprep.subr.mxu0 0.0
    %1855 = vmatpush1.msra.mxu0 %v56
    %1856 = vmatprep.subr.mxu0 0.0
    %1857 = vmatpush1.msra.mxu0 0.0
    %1858 = vmatprep.subr.mxu0 0.0
    %1859 = vmatpush1.msra.mxu0 0.0
    %1860 = vmatprep.subr.mxu0 0.0
    %1861 = vmatpush1.msra.mxu0 0.0
    %1862 = vmatprep.subr.mxu0 0.0
    %1863 = vmatpush1.msra.mxu0 0.0
    %1864 = vmatprep.subr.mxu0 0.0
    %1865 = vmatpush1.msra.mxu0 0.0
    %1866 = vmatprep.subr.mxu0 0.0
    %1867 = vmatpush1.msra.mxu0 0.0
    %1868 = vmatprep.subr.mxu0 0.0
    %1869 = vmatpush1.msra.mxu0 0.0
    %1870 = vmatprep.subr.mxu0 0.0
    %1871 = vmatpush1.msra.mxu0 0.0
    %1872 = vmatprep.subr.mxu0 0.0
    %1873 = vmatpush1.msra.mxu0 0.0
    %1874 = vmatprep.subr.mxu0 0.0
    %1875 = vmatpush1.msra.mxu0 0.0
    %1876 = vmatprep.subr.mxu0 0.0
    %1877 = vmatpush1.msra.mxu0 0.0
    %1878 = vmatprep.subr.mxu0 0.0
    %1879 = vmatpush1.msra.mxu0 0.0
    %1880 = vmatprep.subr.mxu0 0.0
    %1881 = vmatpush1.msra.mxu0 0.0
    %1882 = vmatprep.subr.mxu0 0.0
    %1883 = vmatpush1.msra.mxu0 0.0
    %1884 = vmatprep.subr.mxu0 0.0
    %1885 = vmatpush1.msra.mxu0 0.0
    %1886 = vmatprep.subr.mxu0 0.0
    %1887 = vmatpush1.msra.mxu0 0.0
    %1888 = vmatprep.subr.mxu0 0.0
    %1889 = vmatpush1.msra.mxu0 0.0
    %1890 = vmatprep.subr.mxu0 0.0
    %1891 = vmatpush1.msra.mxu0 0.0
    %1892 = vmatprep.subr.mxu0 0.0
    %1893 = vmatpush1.msra.mxu0 0.0
    %1894 = vmatprep.subr.mxu0 0.0
    %1895 = vmatpush1.msra.mxu0 0.0
    %1896 = vmatprep.subr.mxu0 0.0
    %1897 = vmatpush1.msra.mxu0 0.0
    %1898 = vmatprep.subr.mxu0 0.0
    %1899 = vmatpush1.msra.mxu0 0.0
    %1900 = vmatprep.subr.mxu0 0.0
    %1901 = vmatpush1.msra.mxu0 0.0
    %1902 = vmatprep.subr.mxu0 0.0
    %1903 = vmatpush1.msra.mxu0 0.0
    %1904 = vmatprep.subr.mxu0 0.0
    %1905 = vmatpush1.msra.mxu0 0.0
    %1906 = vmatprep.subr.mxu0 0.0
    %1907 = vmatpush1.msra.mxu0 0.0
    %1908 = vmatprep.subr.mxu0 0.0
    %1909 = vmatpush1.msra.mxu0 0.0
    %1910 = vmatprep.subr.mxu0 0.0
    %1911 = vmatpush1.msra.mxu0 0.0
    %1912 = vmatprep.mubr.f32.mxu0 0.0
    %1913 = vmatmul.mubr.f32.gmra.mrb[0].mxu0 %v1843
    %v1914 = vpop.f32.mrb[0].mxu0
    %v1915 = vadd.f32 %v1841, %v1914
    %v1916 = vpop.f32.mrb[0].mxu0
    %1917 = vmatprep.mubr.f32.mxu0 0.0
    %1918 = vmatmul.mubr.f32.gmra.mrb[0].mxu0 %v1846
    %v1919 = vpop.f32.mrb[0].mxu0
    %v1920 = vadd.f32 %v1841, %v1919
    %v1921 = vpop.f32.mrb[0].mxu0
    %1922 = vdwg.mxu0
    %1923 = vst [vmem:[%s2] sm:$0xff] %v1915
    %1924 = vst [vmem:[%s2 + $0x8] sm:$0xff] %v1920
    // Predicated region
    $region18: #{lstm_decoder_forward.1} parent=1 // pred_check
      _
    $region19: #{lstm_decoder_forward.1} parent=1 // pred_check_branch
      %1926 = sbr.rel (0) target = $region21
    $region20: #{lstm_decoder_forward.1} parent=1 // pred_region
      _
    $region21: #{lstm_decoder_forward.1} parent=1 // pred_fallthru
      _
    // Predicated region
    $region22: #{lstm_decoder_forward.1} parent=1 // pred_check
      _
    $region23: #{lstm_decoder_forward.1} parent=1 // pred_check_branch
      %1928 = sbr.rel (0) target = $region25
    $region24: #{lstm_decoder_forward.1} parent=1 // pred_region
      _
    $region25: #{lstm_decoder_forward.1} parent=1 // pred_fallthru
      _
    %1929 = vsyncpa [#allocation4], 1
    %1930 = vsyncpa [#allocation6], 1

</llo_original>
